<compile_context>
chip_gen: v7x
topology: tpu7x:2x2x1
jax: 0.10.0
libtpu: 0.0.40
codegen_flags: <defaults>
</compile_context>

<pallas_src>
import math
import functools

import jax
import jax.numpy as jnp
from jax.experimental import pallas as pl
from jax.experimental.pallas import tpu as pltpu


def _layer_norm(y, gamma, beta, eps=1e-5):
    mu = jnp.mean(y, axis=-1, keepdims=True)
    var = jnp.mean((y - mu) ** 2, axis=-1, keepdims=True)
    return (y - mu) * jax.lax.rsqrt(var + eps) * gamma + beta


def _encoder_block_body(xq_ref, xkv_ref,
                        wq_ref, wk_ref, wv_ref, wo_ref,
                        g1_ref, be1_ref,
                        w1_ref, b1_ref, w2_ref, b2_ref,
                        g2_ref, be2_ref,
                        o_ref,
                        *, num_heads):
    f32 = jnp.float32
    bf16 = jnp.bfloat16

    x_q = xq_ref[...]                     # (tq, D) query-row tile (f32, kept for residual)
    x_kv = xkv_ref[...]                   # (S,  D) full sequence for K/V
    tq, d_model = x_q.shape
    s_kv = x_kv.shape[0]
    d_head = d_model // num_heads

    xq_b = x_q.astype(bf16)
    xkv_b = x_kv.astype(bf16)

    # ---- Q/K/V projections: full-width bf16 MXU matmuls, f32 accumulation.
    # (1/sqrt(d_head) is already folded into wq in the wrapper.)
    q = jnp.dot(xq_b, wq_ref[...], preferred_element_type=f32)     # (tq, D)
    k = jnp.dot(xkv_b, wk_ref[...], preferred_element_type=f32)    # (S,  D)
    v = jnp.dot(xkv_b, wv_ref[...], preferred_element_type=f32)    # (S,  D)

    # ---- Head-batched attention: (H, rows, dh) batch layout; no per-head loop/slices.
    qh = jnp.transpose(q.reshape(tq, num_heads, d_head), (1, 0, 2)).astype(bf16)
    kh = jnp.transpose(k.reshape(s_kv, num_heads, d_head), (1, 0, 2)).astype(bf16)
    vh = jnp.transpose(v.reshape(s_kv, num_heads, d_head), (1, 0, 2)).astype(bf16)

    s = jnp.einsum('hqd,hkd->hqk', qh, kh, preferred_element_type=f32)   # (H, tq, S)
    m = jnp.max(s, axis=-1, keepdims=True)
    p = jnp.exp(s - m)                                                   # unnormalized probs
    l = jnp.sum(p, axis=-1, keepdims=True)                               # (H, tq, 1)
    oh = jnp.einsum('hqk,hkd->hqd', p.astype(bf16), vh,
                    preferred_element_type=f32)                          # (H, tq, dh)
    oh = oh * pl.reciprocal(l, approx=True)        # normalize after PV (EUP reciprocal)

    att = jnp.transpose(oh, (1, 0, 2)).reshape(tq, d_model)              # (tq, D)
    att = jnp.dot(att.astype(bf16), wo_ref[...], preferred_element_type=f32)

    # ---- residual 1: x + dropout(LayerNorm1(att));  dropout == identity (eval mode)
    # TODO(synk): training-mode dropout (pltpu.prng_* masking) not implemented.
    x2 = x_q + _layer_norm(att, g1_ref[...], be1_ref[...])

    # ---- position-wise FFN (d_ff == d_model for EncoderBlock)
    h1 = jnp.dot(x2.astype(bf16), w1_ref[...], preferred_element_type=f32) + b1_ref[...]
    h1 = jnp.maximum(h1, 0.0)
    ff = jnp.dot(h1.astype(bf16), w2_ref[...], preferred_element_type=f32) + b2_ref[...]

    # ---- residual 2: x2 + LayerNorm2(ff)
    o_ref[...] = x2 + _layer_norm(ff, g2_ref[...], be2_ref[...])


def encoder_block(x, params, num_heads, *, q_tile=None):
    B, S, D = x.shape
    d_ff = params["w1"].shape[1]
    d_head = D // num_heads

    # Query-row tiling: full S for short sequences, 128-row tiles otherwise.
    if q_tile is None:
        q_tile = S if S <= 128 else 128
    if S % q_tile != 0:
        q_tile = S
    n_q = S // q_tile

    bf16 = jnp.bfloat16
    f32 = jnp.float32

    # bf16 weight tiles (halve HBM/VMEM traffic); fold attention scale into Wq.
    wq = (params["wq"] * (1.0 / math.sqrt(d_head))).astype(bf16)
    wk = params["wk"].astype(bf16)
    wv = params["wv"].astype(bf16)
    wo = params["wo"].astype(bf16)
    w1 = params["w1"].astype(bf16)
    w2 = params["w2"].astype(bf16)

    # Constant-index (grid-resident) operands.
    # TODO(synk): on v7x (64 MiB VMEM) with large D/d_ff, single-buffer the weight specs
    # (pipeline_mode=pl.Buffered(1)) or stream w1/w2 over a K-reduction grid axis.
    full = lambda shape: pl.BlockSpec(shape, lambda b, i: (0, 0))

    weight_specs = [
        full((D, D)), full((D, D)), full((D, D)), full((D, D)),    # Wq Wk Wv Wo
        full((1, D)), full((1, D)),                                # ln1 gamma/beta
        full((D, d_ff)), full((1, d_ff)),                          # fc1 W, b
        full((d_ff, D)), full((1, D)),                             # fc2 W, b
        full((1, D)), full((1, D)),                                # ln2 gamma/beta
    ]
    weight_operands = (
        wq, wk, wv, wo,
        params["ln1_g"].astype(f32), params["ln1_b"].astype(f32),
        w1, params["b1"].astype(f32),
        w2, params["b2"].astype(f32),
        params["ln2_g"].astype(f32), params["ln2_b"].astype(f32),
    )

    body = functools.partial(_encoder_block_body, num_heads=num_heads)

    if n_q == 1:
        # Whole sequence in one query tile: pass x once, reuse the ref for Q and K/V.
        def kernel(x_ref, *rest):
            body(x_ref, x_ref, *rest)
        in_specs = [pl.BlockSpec((None, S, D), lambda b, i: (b, 0, 0))] + weight_specs
        operands = (x,) + weight_operands
    else:
        def kernel(xq_ref, xkv_ref, *rest):
            body(xq_ref, xkv_ref, *rest)
        in_specs = [
            pl.BlockSpec((None, q_tile, D), lambda b, i: (b, i, 0)),   # x: query-row tile
            pl.BlockSpec((None, S, D), lambda b, i: (b, 0, 0)),        # x: full rows for K/V
        ] + weight_specs
        operands = (x, x) + weight_operands

    # TODO(synk): for real model sizes where D % 128 != 0, pad D to a lane-dense multiple
    # of 128 in the wrapper (needs masked LayerNorm statistics); not done here.
    return pl.pallas_call(
        kernel,
        out_shape=jax.ShapeDtypeStruct((B, S, D), f32),
        grid=(B, n_q),
        in_specs=in_specs,
        out_specs=pl.BlockSpec((None, q_tile, D), lambda b, i: (b, i, 0)),
        compiler_params=pltpu.CompilerParams(
            dimension_semantics=("parallel", "parallel"),
            vmem_limit_bytes=64 * 1024 * 1024),
    )(*operands)


def encoder_block_ref(x, params, num_heads):
    """Pure-JAX f32 reference for correctness check."""
    B, S, D = x.shape
    dh = D // num_heads
    q = x @ params["wq"]
    k = x @ params["wk"]
    v = x @ params["wv"]
    q = q.reshape(B, S, num_heads, dh).transpose(0, 2, 1, 3)
    k = k.reshape(B, S, num_heads, dh).transpose(0, 2, 1, 3)
    v = v.reshape(B, S, num_heads, dh).transpose(0, 2, 1, 3)
    s = jnp.einsum("bhqd,bhkd->bhqk", q, k) / math.sqrt(dh)
    p = jax.nn.softmax(s, axis=-1)
    att = jnp.einsum("bhqk,bhkd->bhqd", p, v).transpose(0, 2, 1, 3).reshape(B, S, D)
    att = att @ params["wo"]

    def ln(y, g, b):
        mu = jnp.mean(y, axis=-1, keepdims=True)
        var = jnp.mean((y - mu) ** 2, axis=-1, keepdims=True)
        return (y - mu) / jnp.sqrt(var + 1e-5) * g + b

    x2 = x + ln(att, params["ln1_g"], params["ln1_b"])
    h1 = jax.nn.relu(x2 @ params["w1"] + params["b1"])
    ff = h1 @ params["w2"] + params["b2"]
    return x2 + ln(ff, params["ln2_g"], params["ln2_b"])


if __name__ == "__main__":
    B, S, D = 2, 8, 32
    NUM_HEADS = 4
    D_FF = D  # EncoderBlock builds PositionWiseFeedForward(n_dim, n_dim)

    key = jax.random.PRNGKey(0)
    keys = jax.random.split(key, 8)
    scale = 1.0 / math.sqrt(D)
    params = {
        "wq": jax.random.normal(keys[0], (D, D), jnp.float32) * scale,
        "wk": jax.random.normal(keys[1], (D, D), jnp.float32) * scale,
        "wv": jax.random.normal(keys[2], (D, D), jnp.float32) * scale,
        "wo": jax.random.normal(keys[3], (D, D), jnp.float32) * scale,
        "ln1_g": jnp.ones((1, D), jnp.float32),
        "ln1_b": jnp.zeros((1, D), jnp.float32),
        "w1": jax.random.normal(keys[4], (D, D_FF), jnp.float32) * scale,
        "b1": jax.random.normal(keys[5], (1, D_FF), jnp.float32) * 0.1,
        "w2": jax.random.normal(keys[6], (D_FF, D), jnp.float32) * scale,
        "b2": jax.random.normal(keys[7], (1, D), jnp.float32) * 0.1,
        "ln2_g": jnp.ones((1, D), jnp.float32),
        "ln2_b": jnp.zeros((1, D), jnp.float32),
    }

    x = jax.random.normal(jax.random.PRNGKey(42), (B, S, D), jnp.float32)

    out = encoder_block(x, params, NUM_HEADS)
    out = jax.block_until_ready(out)

    ref = encoder_block_ref(x, params, NUM_HEADS)
    assert out.shape == (B, S, D)
    # bf16 MXU operands + approximate EUP reciprocal vs f32 reference -> relaxed tolerance.
    assert jnp.allclose(out, ref, atol=5e-2, rtol=5e-2), "mismatch vs reference"

    print("KERNEL_OK")
</pallas_src>

<mosaic_0001>
module attributes {stable_mosaic.version = 11 : i64} {
  func.func @kernel(%arg0: i32, %arg1: i32, %arg2: memref<1x8x32xf32, #tpu.memory_space<vmem>>, %arg3: memref<32x32xbf16, #tpu.memory_space<vmem>>, %arg4: memref<32x32xbf16, #tpu.memory_space<vmem>>, %arg5: memref<32x32xbf16, #tpu.memory_space<vmem>>, %arg6: memref<32x32xbf16, #tpu.memory_space<vmem>>, %arg7: memref<1x32xf32, #tpu.memory_space<vmem>>, %arg8: memref<1x32xf32, #tpu.memory_space<vmem>>, %arg9: memref<32x32xbf16, #tpu.memory_space<vmem>>, %arg10: memref<1x32xf32, #tpu.memory_space<vmem>>, %arg11: memref<32x32xbf16, #tpu.memory_space<vmem>>, %arg12: memref<1x32xf32, #tpu.memory_space<vmem>>, %arg13: memref<1x32xf32, #tpu.memory_space<vmem>>, %arg14: memref<1x32xf32, #tpu.memory_space<vmem>>, %arg15: memref<1x8x32xf32, #tpu.memory_space<vmem>>) attributes {dimension_semantics = [#tpu.dimension_semantics<parallel>, #tpu.dimension_semantics<parallel>], iteration_bounds = array<i64: 2, 1>, scalar_prefetch = 0 : i64, scratch_operands = 0 : i64, tpu.core_type = #tpu.core_type<tc>, window_params = [{transform_indices = @transform_0, window_bounds = array<i64: 1, 8, 32>}, {pipeline_mode = #tpu.pipeline_mode<synchronous>, transform_indices = @transform_1, window_bounds = array<i64: 32, 32>}, {pipeline_mode = #tpu.pipeline_mode<synchronous>, transform_indices = @transform_2, window_bounds = array<i64: 32, 32>}, {pipeline_mode = #tpu.pipeline_mode<synchronous>, transform_indices = @transform_3, window_bounds = array<i64: 32, 32>}, {pipeline_mode = #tpu.pipeline_mode<synchronous>, transform_indices = @transform_4, window_bounds = array<i64: 32, 32>}, {pipeline_mode = #tpu.pipeline_mode<synchronous>, transform_indices = @transform_5, window_bounds = array<i64: 1, 32>}, {pipeline_mode = #tpu.pipeline_mode<synchronous>, transform_indices = @transform_6, window_bounds = array<i64: 1, 32>}, {pipeline_mode = #tpu.pipeline_mode<synchronous>, transform_indices = @transform_7, window_bounds = array<i64: 32, 32>}, {pipeline_mode = #tpu.pipeline_mode<synchronous>, transform_indices = @transform_8, window_bounds = array<i64: 1, 32>}, {pipeline_mode = #tpu.pipeline_mode<synchronous>, transform_indices = @transform_9, window_bounds = array<i64: 32, 32>}, {pipeline_mode = #tpu.pipeline_mode<synchronous>, transform_indices = @transform_10, window_bounds = array<i64: 1, 32>}, {pipeline_mode = #tpu.pipeline_mode<synchronous>, transform_indices = @transform_11, window_bounds = array<i64: 1, 32>}, {pipeline_mode = #tpu.pipeline_mode<synchronous>, transform_indices = @transform_12, window_bounds = array<i64: 1, 32>}, {transform_indices = @transform_13, window_bounds = array<i64: 1, 8, 32>}]} {
    %c0 = arith.constant 0 : index
    %c0_0 = arith.constant 0 : index
    %c0_1 = arith.constant 0 : index
    %0 = vector.load %arg2[%c0, %c0_0, %c0_1] : memref<1x8x32xf32, #tpu.memory_space<vmem>>, vector<1x8x32xf32>
    %1 = vector.shape_cast %0 : vector<1x8x32xf32> to vector<8x32xf32>
    %c0_2 = arith.constant 0 : index
    %c0_3 = arith.constant 0 : index
    %c0_4 = arith.constant 0 : index
    %2 = vector.load %arg2[%c0_2, %c0_3, %c0_4] : memref<1x8x32xf32, #tpu.memory_space<vmem>>, vector<1x8x32xf32>
    %3 = vector.shape_cast %2 : vector<1x8x32xf32> to vector<8x32xf32>
    %4 = arith.truncf %1 : vector<8x32xf32> to vector<8x32xbf16>
    %5 = arith.truncf %3 : vector<8x32xf32> to vector<8x32xbf16>
    %c0_5 = arith.constant 0 : index
    %c0_6 = arith.constant 0 : index
    %6 = vector.load %arg3[%c0_5, %c0_6] : memref<32x32xbf16, #tpu.memory_space<vmem>>, vector<32x32xbf16>
    %cst = arith.constant dense<0.000000e+00> : vector<8x32xf32>
    %7 = tpu.matmul %4, %6, %cst {dimension_numbers = #tpu.dot_dimension_numbers<[1], [0], [0], [1], [0, 0, 1, 1], [], []>} : vector<8x32xbf16>, vector<32x32xbf16>, vector<8x32xf32> -> vector<8x32xf32>
    %c0_7 = arith.constant 0 : index
    %c0_8 = arith.constant 0 : index
    %8 = vector.load %arg4[%c0_7, %c0_8] : memref<32x32xbf16, #tpu.memory_space<vmem>>, vector<32x32xbf16>
    %cst_9 = arith.constant dense<0.000000e+00> : vector<8x32xf32>
    %9 = tpu.matmul %5, %8, %cst_9 {dimension_numbers = #tpu.dot_dimension_numbers<[1], [0], [0], [1], [0, 0, 1, 1], [], []>} : vector<8x32xbf16>, vector<32x32xbf16>, vector<8x32xf32> -> vector<8x32xf32>
    %c0_10 = arith.constant 0 : index
    %c0_11 = arith.constant 0 : index
    %10 = vector.load %arg5[%c0_10, %c0_11] : memref<32x32xbf16, #tpu.memory_space<vmem>>, vector<32x32xbf16>
    %cst_12 = arith.constant dense<0.000000e+00> : vector<8x32xf32>
    %11 = tpu.matmul %5, %10, %cst_12 {dimension_numbers = #tpu.dot_dimension_numbers<[1], [0], [0], [1], [0, 0, 1, 1], [], []>} : vector<8x32xbf16>, vector<32x32xbf16>, vector<8x32xf32> -> vector<8x32xf32>
    %12 = vector.shape_cast %7 : vector<8x32xf32> to vector<8x4x8xf32>
    %13 = tpu.transpose %12, [1, 0, 2] : vector<8x4x8xf32> -> vector<4x8x8xf32>
    %14 = arith.truncf %13 : vector<4x8x8xf32> to vector<4x8x8xbf16>
    %15 = vector.shape_cast %9 : vector<8x32xf32> to vector<8x4x8xf32>
    %16 = tpu.transpose %15, [1, 0, 2] : vector<8x4x8xf32> -> vector<4x8x8xf32>
    %17 = arith.truncf %16 : vector<4x8x8xf32> to vector<4x8x8xbf16>
    %18 = vector.shape_cast %11 : vector<8x32xf32> to vector<8x4x8xf32>
    %19 = tpu.transpose %18, [1, 0, 2] : vector<8x4x8xf32> -> vector<4x8x8xf32>
    %20 = arith.truncf %19 : vector<4x8x8xf32> to vector<4x8x8xbf16>
    "tpu.trace_start"() <{level = 10 : i32, message = "hqd,hkd->hqk"}> : () -> ()
    %cst_13 = arith.constant dense<0.000000e+00> : vector<4x8x8xf32>
    %21 = tpu.matmul %14, %17, %cst_13 {dimension_numbers = #tpu.dot_dimension_numbers<[2], [2], [1], [1], [0, 0, 0, 1, 1, 1], [0], [0]>} : vector<4x8x8xbf16>, vector<4x8x8xbf16>, vector<4x8x8xf32> -> vector<4x8x8xf32>
    "tpu.trace_stop"() : () -> ()
    %cst_14 = arith.constant dense<0xFF800000> : vector<4x8xf32>
    %22 = vector.multi_reduction <maximumf>, %21, %cst_14 [2] : vector<4x8x8xf32> to vector<4x8xf32>
    %23 = vector.shape_cast %22 : vector<4x8xf32> to vector<4x8x1xf32>
    %24 = vector.broadcast %23 : vector<4x8x1xf32> to vector<4x8x8xf32>
    %25 = arith.subf %21, %24 : vector<4x8x8xf32>
    %26 = math.exp %25 : vector<4x8x8xf32>
    %cst_15 = arith.constant dense<0.000000e+00> : vector<4x8xf32>
    %27 = vector.multi_reduction <add>, %26, %cst_15 [2] : vector<4x8x8xf32> to vector<4x8xf32>
    %28 = vector.shape_cast %27 : vector<4x8xf32> to vector<4x8x1xf32>
    %29 = arith.truncf %26 : vector<4x8x8xf32> to vector<4x8x8xbf16>
    "tpu.trace_start"() <{level = 10 : i32, message = "hqk,hkd->hqd"}> : () -> ()
    %cst_16 = arith.constant dense<0.000000e+00> : vector<4x8x8xf32>
    %30 = tpu.matmul %29, %20, %cst_16 {dimension_numbers = #tpu.dot_dimension_numbers<[2], [1], [1], [2], [0, 0, 0, 1, 1, 2], [0], [0]>} : vector<4x8x8xbf16>, vector<4x8x8xbf16>, vector<4x8x8xf32> -> vector<4x8x8xf32>
    "tpu.trace_stop"() : () -> ()
    %31 = tpu.reciprocal %28 {approx = true} : vector<4x8x1xf32> -> vector<4x8x1xf32>
    %32 = vector.broadcast %31 : vector<4x8x1xf32> to vector<4x8x8xf32>
    %33 = arith.mulf %30, %32 : vector<4x8x8xf32>
    %34 = tpu.transpose %33, [1, 0, 2] : vector<4x8x8xf32> -> vector<8x4x8xf32>
    %35 = vector.shape_cast %34 : vector<8x4x8xf32> to vector<8x32xf32>
    %36 = arith.truncf %35 : vector<8x32xf32> to vector<8x32xbf16>
    %c0_17 = arith.constant 0 : index
    %c0_18 = arith.constant 0 : index
    %37 = vector.load %arg6[%c0_17, %c0_18] : memref<32x32xbf16, #tpu.memory_space<vmem>>, vector<32x32xbf16>
    %cst_19 = arith.constant dense<0.000000e+00> : vector<8x32xf32>
    %38 = tpu.matmul %36, %37, %cst_19 {dimension_numbers = #tpu.dot_dimension_numbers<[1], [0], [0], [1], [0, 0, 1, 1], [], []>} : vector<8x32xbf16>, vector<32x32xbf16>, vector<8x32xf32> -> vector<8x32xf32>
    %c0_20 = arith.constant 0 : index
    %c0_21 = arith.constant 0 : index
    %39 = vector.load %arg7[%c0_20, %c0_21] : memref<1x32xf32, #tpu.memory_space<vmem>>, vector<1x32xf32>
    %c0_22 = arith.constant 0 : index
    %c0_23 = arith.constant 0 : index
    %40 = vector.load %arg8[%c0_22, %c0_23] : memref<1x32xf32, #tpu.memory_space<vmem>>, vector<1x32xf32>
    %cst_24 = arith.constant dense<0.000000e+00> : vector<8xf32>
    %41 = vector.multi_reduction <add>, %38, %cst_24 [1] : vector<8x32xf32> to vector<8xf32>
    %42 = vector.shape_cast %41 : vector<8xf32> to vector<8x1xf32>
    %cst_25 = arith.constant 3.200000e+01 : f32
    %43 = vector.broadcast %cst_25 : f32 to vector<8x1xf32>
    %44 = arith.divf %42, %43 : vector<8x1xf32>
    %45 = vector.broadcast %44 : vector<8x1xf32> to vector<8x32xf32>
    %46 = arith.subf %38, %45 : vector<8x32xf32>
    %47 = arith.mulf %46, %46 : vector<8x32xf32>
    %cst_26 = arith.constant dense<0.000000e+00> : vector<8xf32>
    %48 = vector.multi_reduction <add>, %47, %cst_26 [1] : vector<8x32xf32> to vector<8xf32>
    %49 = vector.shape_cast %48 : vector<8xf32> to vector<8x1xf32>
    %cst_27 = arith.constant 3.200000e+01 : f32
    %50 = vector.broadcast %cst_27 : f32 to vector<8x1xf32>
    %51 = arith.divf %49, %50 : vector<8x1xf32>
    %52 = vector.broadcast %44 : vector<8x1xf32> to vector<8x32xf32>
    %53 = arith.subf %38, %52 : vector<8x32xf32>
    %cst_28 = arith.constant 9.99999974E-6 : f32
    %54 = vector.broadcast %cst_28 : f32 to vector<8x1xf32>
    %55 = arith.addf %51, %54 : vector<8x1xf32>
    %56 = math.rsqrt %55 : vector<8x1xf32>
    %57 = vector.broadcast %56 : vector<8x1xf32> to vector<8x32xf32>
    %58 = arith.mulf %53, %57 : vector<8x32xf32>
    %59 = vector.broadcast %39 : vector<1x32xf32> to vector<8x32xf32>
    %60 = arith.mulf %58, %59 : vector<8x32xf32>
    %61 = vector.broadcast %40 : vector<1x32xf32> to vector<8x32xf32>
    %62 = arith.addf %60, %61 : vector<8x32xf32>
    %63 = arith.addf %1, %62 : vector<8x32xf32>
    %64 = arith.truncf %63 : vector<8x32xf32> to vector<8x32xbf16>
    %c0_29 = arith.constant 0 : index
    %c0_30 = arith.constant 0 : index
    %65 = vector.load %arg9[%c0_29, %c0_30] : memref<32x32xbf16, #tpu.memory_space<vmem>>, vector<32x32xbf16>
    %cst_31 = arith.constant dense<0.000000e+00> : vector<8x32xf32>
    %66 = tpu.matmul %64, %65, %cst_31 {dimension_numbers = #tpu.dot_dimension_numbers<[1], [0], [0], [1], [0, 0, 1, 1], [], []>} : vector<8x32xbf16>, vector<32x32xbf16>, vector<8x32xf32> -> vector<8x32xf32>
    %c0_32 = arith.constant 0 : index
    %c0_33 = arith.constant 0 : index
    %67 = vector.load %arg10[%c0_32, %c0_33] : memref<1x32xf32, #tpu.memory_space<vmem>>, vector<1x32xf32>
    %68 = vector.broadcast %67 : vector<1x32xf32> to vector<8x32xf32>
    %69 = arith.addf %66, %68 : vector<8x32xf32>
    %cst_34 = arith.constant 0.000000e+00 : f32
    %70 = vector.broadcast %cst_34 : f32 to vector<8x32xf32>
    %71 = arith.maximumf %69, %70 : vector<8x32xf32>
    %72 = arith.truncf %71 : vector<8x32xf32> to vector<8x32xbf16>
    %c0_35 = arith.constant 0 : index
    %c0_36 = arith.constant 0 : index
    %73 = vector.load %arg11[%c0_35, %c0_36] : memref<32x32xbf16, #tpu.memory_space<vmem>>, vector<32x32xbf16>
    %cst_37 = arith.constant dense<0.000000e+00> : vector<8x32xf32>
    %74 = tpu.matmul %72, %73, %cst_37 {dimension_numbers = #tpu.dot_dimension_numbers<[1], [0], [0], [1], [0, 0, 1, 1], [], []>} : vector<8x32xbf16>, vector<32x32xbf16>, vector<8x32xf32> -> vector<8x32xf32>
    %c0_38 = arith.constant 0 : index
    %c0_39 = arith.constant 0 : index
    %75 = vector.load %arg12[%c0_38, %c0_39] : memref<1x32xf32, #tpu.memory_space<vmem>>, vector<1x32xf32>
    %76 = vector.broadcast %75 : vector<1x32xf32> to vector<8x32xf32>
    %77 = arith.addf %74, %76 : vector<8x32xf32>
    %c0_40 = arith.constant 0 : index
    %c0_41 = arith.constant 0 : index
    %78 = vector.load %arg13[%c0_40, %c0_41] : memref<1x32xf32, #tpu.memory_space<vmem>>, vector<1x32xf32>
    %c0_42 = arith.constant 0 : index
    %c0_43 = arith.constant 0 : index
    %79 = vector.load %arg14[%c0_42, %c0_43] : memref<1x32xf32, #tpu.memory_space<vmem>>, vector<1x32xf32>
    %cst_44 = arith.constant dense<0.000000e+00> : vector<8xf32>
    %80 = vector.multi_reduction <add>, %77, %cst_44 [1] : vector<8x32xf32> to vector<8xf32>
    %81 = vector.shape_cast %80 : vector<8xf32> to vector<8x1xf32>
    %cst_45 = arith.constant 3.200000e+01 : f32
    %82 = vector.broadcast %cst_45 : f32 to vector<8x1xf32>
    %83 = arith.divf %81, %82 : vector<8x1xf32>
    %84 = vector.broadcast %83 : vector<8x1xf32> to vector<8x32xf32>
    %85 = arith.subf %77, %84 : vector<8x32xf32>
    %86 = arith.mulf %85, %85 : vector<8x32xf32>
    %cst_46 = arith.constant dense<0.000000e+00> : vector<8xf32>
    %87 = vector.multi_reduction <add>, %86, %cst_46 [1] : vector<8x32xf32> to vector<8xf32>
    %88 = vector.shape_cast %87 : vector<8xf32> to vector<8x1xf32>
    %cst_47 = arith.constant 3.200000e+01 : f32
    %89 = vector.broadcast %cst_47 : f32 to vector<8x1xf32>
    %90 = arith.divf %88, %89 : vector<8x1xf32>
    %91 = vector.broadcast %83 : vector<8x1xf32> to vector<8x32xf32>
    %92 = arith.subf %77, %91 : vector<8x32xf32>
    %cst_48 = arith.constant 9.99999974E-6 : f32
    %93 = vector.broadcast %cst_48 : f32 to vector<8x1xf32>
    %94 = arith.addf %90, %93 : vector<8x1xf32>
    %95 = math.rsqrt %94 : vector<8x1xf32>
    %96 = vector.broadcast %95 : vector<8x1xf32> to vector<8x32xf32>
    %97 = arith.mulf %92, %96 : vector<8x32xf32>
    %98 = vector.broadcast %78 : vector<1x32xf32> to vector<8x32xf32>
    %99 = arith.mulf %97, %98 : vector<8x32xf32>
    %100 = vector.broadcast %79 : vector<1x32xf32> to vector<8x32xf32>
    %101 = arith.addf %99, %100 : vector<8x32xf32>
    %102 = arith.addf %63, %101 : vector<8x32xf32>
    %c0_49 = arith.constant 0 : index
    %c0_50 = arith.constant 0 : index
    %c0_51 = arith.constant 0 : index
    %103 = vector.load %arg15[%c0_49, %c0_50, %c0_51] : memref<1x8x32xf32, #tpu.memory_space<vmem>>, vector<1x8x32xf32>
    %104 = vector.shape_cast %103 : vector<1x8x32xf32> to vector<8x32xf32>
    %105 = vector.shape_cast %102 : vector<8x32xf32> to vector<1x8x32xf32>
    tpu.vector_store %arg15[%c0_49, %c0_50, %c0_51], %105 {strides = array<i32>} : memref<1x8x32xf32, #tpu.memory_space<vmem>>, vector<1x8x32xf32>,
    return
  }
  func.func @transform_0(%arg0: i32, %arg1: i32) -> (i32, i32, i32) {
    %c0_i32 = arith.constant 0 : i32
    %c0_i32_0 = arith.constant 0 : i32
    %c0_i32_1 = arith.constant 0 : i32
    return %arg0, %c0_i32, %c0_i32_0 : i32, i32, i32
  }
  func.func @transform_1(%arg0: i32, %arg1: i32) -> (i32, i32) {
    %c0_i32 = arith.constant 0 : i32
    %c0_i32_0 = arith.constant 0 : i32
    %c0_i32_1 = arith.constant 0 : i32
    return %c0_i32, %c0_i32_0 : i32, i32
  }
  func.func @transform_2(%arg0: i32, %arg1: i32) -> (i32, i32) {
    %c0_i32 = arith.constant 0 : i32
    %c0_i32_0 = arith.constant 0 : i32
    %c0_i32_1 = arith.constant 0 : i32
    return %c0_i32, %c0_i32_0 : i32, i32
  }
  func.func @transform_3(%arg0: i32, %arg1: i32) -> (i32, i32) {
    %c0_i32 = arith.constant 0 : i32
    %c0_i32_0 = arith.constant 0 : i32
    %c0_i32_1 = arith.constant 0 : i32
    return %c0_i32, %c0_i32_0 : i32, i32
  }
  func.func @transform_4(%arg0: i32, %arg1: i32) -> (i32, i32) {
    %c0_i32 = arith.constant 0 : i32
    %c0_i32_0 = arith.constant 0 : i32
    %c0_i32_1 = arith.constant 0 : i32
    return %c0_i32, %c0_i32_0 : i32, i32
  }
  func.func @transform_5(%arg0: i32, %arg1: i32) -> (i32, i32) {
    %c0_i32 = arith.constant 0 : i32
    %c0_i32_0 = arith.constant 0 : i32
    %c0_i32_1 = arith.constant 0 : i32
    return %c0_i32, %c0_i32_0 : i32, i32
  }
  func.func @transform_6(%arg0: i32, %arg1: i32) -> (i32, i32) {
    %c0_i32 = arith.constant 0 : i32
    %c0_i32_0 = arith.constant 0 : i32
    %c0_i32_1 = arith.constant 0 : i32
    return %c0_i32, %c0_i32_0 : i32, i32
  }
  func.func @transform_7(%arg0: i32, %arg1: i32) -> (i32, i32) {
    %c0_i32 = arith.constant 0 : i32
    %c0_i32_0 = arith.constant 0 : i32
    %c0_i32_1 = arith.constant 0 : i32
    return %c0_i32, %c0_i32_0 : i32, i32
  }
  func.func @transform_8(%arg0: i32, %arg1: i32) -> (i32, i32) {
    %c0_i32 = arith.constant 0 : i32
    %c0_i32_0 = arith.constant 0 : i32
    %c0_i32_1 = arith.constant 0 : i32
    return %c0_i32, %c0_i32_0 : i32, i32
  }
  func.func @transform_9(%arg0: i32, %arg1: i32) -> (i32, i32) {
    %c0_i32 = arith.constant 0 : i32
    %c0_i32_0 = arith.constant 0 : i32
    %c0_i32_1 = arith.constant 0 : i32
    return %c0_i32, %c0_i32_0 : i32, i32
  }
  func.func @transform_10(%arg0: i32, %arg1: i32) -> (i32, i32) {
    %c0_i32 = arith.constant 0 : i32
    %c0_i32_0 = arith.constant 0 : i32
    %c0_i32_1 = arith.constant 0 : i32
    return %c0_i32, %c0_i32_0 : i32, i32
  }
  func.func @transform_11(%arg0: i32, %arg1: i32) -> (i32, i32) {
    %c0_i32 = arith.constant 0 : i32
    %c0_i32_0 = arith.constant 0 : i32
    %c0_i32_1 = arith.constant 0 : i32
    return %c0_i32, %c0_i32_0 : i32, i32
  }
  func.func @transform_12(%arg0: i32, %arg1: i32) -> (i32, i32) {
    %c0_i32 = arith.constant 0 : i32
    %c0_i32_0 = arith.constant 0 : i32
    %c0_i32_1 = arith.constant 0 : i32
    return %c0_i32, %c0_i32_0 : i32, i32
  }
  func.func @transform_13(%arg0: i32, %arg1: i32) -> (i32, i32, i32) {
    %c0_i32 = arith.constant 0 : i32
    %c0_i32_0 = arith.constant 0 : i32
    return %arg0, %arg1, %c0_i32 : i32, i32, i32
  }
}

</mosaic_0001>

<llo_original>
// kernel: tpu_custom_call.1
$region0: #{tpu_custom_call.1}
  #allocation0 [shape = 'u32[]', space=smem, size = 0x4, offset = 0x4, fixed_abs, tag = 'smem constant byte address 0x4 - core index']
  #allocation1 [shape = 'u32[144,128]{1,0:T(1,128)}', space=vmem, size = 0x12000, scoped, tag = 'internal scratch']
  %s0 = inlined_call_operand.hbm [shape: f32[2,8,32], index: 0, kind: input, shape index: {}]
  %s1 = inlined_call_operand.hbm [shape: bf16[32,32], index: 1, kind: input, shape index: {}]
  %s2 = inlined_call_operand.hbm [shape: bf16[32,32], index: 2, kind: input, shape index: {}]
  %s3 = inlined_call_operand.hbm [shape: bf16[32,32], index: 3, kind: input, shape index: {}]
  %s4 = inlined_call_operand.hbm [shape: bf16[32,32], index: 4, kind: input, shape index: {}]
  %s5 = inlined_call_operand.hbm [shape: f32[1,32], index: 5, kind: input, shape index: {}]
  %s6 = inlined_call_operand.hbm [shape: f32[1,32], index: 6, kind: input, shape index: {}]
  %s7 = inlined_call_operand.hbm [shape: bf16[32,32], index: 7, kind: input, shape index: {}]
  %s8 = inlined_call_operand.hbm [shape: f32[1,32], index: 8, kind: input, shape index: {}]
  %s9 = inlined_call_operand.hbm [shape: bf16[32,32], index: 9, kind: input, shape index: {}]
  %s10 = inlined_call_operand.hbm [shape: f32[1,32], index: 10, kind: input, shape index: {}]
  %s11 = inlined_call_operand.hbm [shape: f32[1,32], index: 11, kind: input, shape index: {}]
  %s12 = inlined_call_operand.hbm [shape: f32[1,32], index: 12, kind: input, shape index: {}]
  %s13 = inlined_call_operand.hbm [shape: f32[2,8,32], index: 13, kind: output, shape index: {}]
  %s14 = sld [smem:[#allocation0]]
  $region137: #{tpu_custom_call.1} parent=0
    _
  %s16 = ssub.s32 1, %s14
  %s17 = scalar_select 0, %s16, %s14
  $region1: #{tpu_custom_call.1} parent=0
    #allocation2 [shape = 'u8[8192]{0}', space=vmem, size = 0x2000, scoped, tag = 'input window, operand 0']
    #allocation3 [shape = 's32[2]{0}', space=sflag, size = 0x8, scoped, tag = 'scoped memory for tpu_custom_call.1']
    #allocation4 [shape = 's32[2]{0}', space=sflag, size = 0x8, scoped, tag = 'scoped memory for tpu_custom_call.1']
    #allocation5 [shape = 'u8[8192]{0}', space=vmem, size = 0x2000, scoped, tag = 'input window, operand 1, single buffered']
    #allocation6 [shape = 's32[1]{0}', space=sflag, size = 0x4, scoped, tag = 'scoped memory for tpu_custom_call.1']
    #allocation7 [shape = 'u8[8192]{0}', space=vmem, size = 0x2000, scoped, tag = 'input window, operand 2, single buffered']
    #allocation8 [shape = 'u8[8192]{0}', space=vmem, size = 0x2000, scoped, tag = 'input window, operand 3, single buffered']
    #allocation9 [shape = 's32[1]{0}', space=sflag, size = 0x4, scoped, tag = 'scoped memory for tpu_custom_call.1']
    #allocation10 [shape = 'u8[8192]{0}', space=vmem, size = 0x2000, scoped, tag = 'input window, operand 4, single buffered']
    #allocation11 [shape = 'u8[512]{0}', space=vmem, size = 0x400, scoped, tag = 'input window, operand 5, single buffered']
    #allocation12 [shape = 's32[1]{0}', space=sflag, size = 0x4, scoped, tag = 'scoped memory for tpu_custom_call.1']
    #allocation13 [shape = 'u8[512]{0}', space=vmem, size = 0x400, scoped, tag = 'input window, operand 6, single buffered']
    #allocation14 [shape = 'u8[8192]{0}', space=vmem, size = 0x2000, scoped, tag = 'input window, operand 7, single buffered']
    #allocation15 [shape = 's32[1]{0}', space=sflag, size = 0x4, scoped, tag = 'scoped memory for tpu_custom_call.1']
    #allocation16 [shape = 'u8[512]{0}', space=vmem, size = 0x400, scoped, tag = 'input window, operand 8, single buffered']
    #allocation17 [shape = 'u8[8192]{0}', space=vmem, size = 0x2000, scoped, tag = 'input window, operand 9, single buffered']
    #allocation18 [shape = 's32[1]{0}', space=sflag, size = 0x4, scoped, tag = 'scoped memory for tpu_custom_call.1']
    #allocation19 [shape = 'u8[512]{0}', space=vmem, size = 0x400, scoped, tag = 'input window, operand 10, single buffered']
    #allocation20 [shape = 'u8[512]{0}', space=vmem, size = 0x400, scoped, tag = 'input window, operand 11, single buffered']
    #allocation21 [shape = 's32[1]{0}', space=sflag, size = 0x4, scoped, tag = 'scoped memory for tpu_custom_call.1']
    #allocation22 [shape = 'u8[512]{0}', space=vmem, size = 0x400, scoped, tag = 'input window, operand 12, single buffered']
    #allocation23 [shape = 'u8[8192]{0}', space=vmem, size = 0x2000, scoped, tag = 'output window, operand 0']
    %18 = vsyncpa [#allocation3], 0
    %s19 = scalar_lea.sflag [#allocation3], 1
    %20 = vsyncpa %s19, 0
    %21 = vsyncpa [#allocation6], 0
    %22 = vsyncpa [#allocation9], 0
    %23 = vsyncpa [#allocation12], 0
    %24 = vsyncpa [#allocation15], 0
    %25 = vsyncpa [#allocation18], 0
    %26 = vsyncpa [#allocation21], 0
    %27 = vsyncpa [#allocation4], 0
    %s28 = scalar_lea.sflag [#allocation4], 1
    %29 = vsyncpa %s28, 0
    loop: start=0, step=1, limit=4
    $region2: #{tpu_custom_call.1} parent=1 // loop_pre_header
      _
    $region3: #{tpu_custom_call.1} parent=1 // loop_header
      %s31 = sphi 0, %s35
      %p32 = scmp.ge.s32.totalorder %s31, 4
      %s38 = sphi 0, %s50
      %s39 = sphi 0, %s46
      %s40 = sphi 0, %s38
      %s41 = sphi 0, %s39
      %s42 = sphi 0, %s40
      %s43 = sphi 0, %s41
      %s53 = sphi 0, %s55
      %s56 = sphi 0, %s53
      %s57 = sphi 0, %s56
      %s73 = sphi 0, %s57
      %s77 = sphi 0, %s77
      %s79 = sphi 0, %s77
      %s80 = sphi 0, %s79
      %s94 = sphi 0, %s80
      %s98 = sphi 0, %s98
      %s100 = sphi 0, %s98
      %s101 = sphi 0, %s100
      %s115 = sphi 0, %s101
      %s119 = sphi 0, %s119
      %s121 = sphi 0, %s119
      %s122 = sphi 0, %s121
      %s136 = sphi 0, %s122
      %s140 = sphi 0, %s140
      %s142 = sphi 0, %s140
      %s143 = sphi 0, %s142
      %s157 = sphi 0, %s143
      %s161 = sphi 0, %s161
      %s163 = sphi 0, %s161
      %s164 = sphi 0, %s163
      %s178 = sphi 0, %s164
      %s182 = sphi 0, %s182
      %s184 = sphi 0, %s182
      %s185 = sphi 0, %s184
      %s199 = sphi 0, %s185
      %s203 = sphi 0, %s203
      %s205 = sphi 0, %s203
      %s206 = sphi 0, %s205
      %s220 = sphi 0, %s206
      %s224 = sphi 0, %s224
      %s226 = sphi 0, %s224
      %s227 = sphi 0, %s226
      %s241 = sphi 0, %s227
      %s245 = sphi 0, %s245
      %s247 = sphi 0, %s245
      %s248 = sphi 0, %s247
      %s262 = sphi 0, %s248
      %s266 = sphi 0, %s266
      %s268 = sphi 0, %s266
      %s269 = sphi 0, %s268
      %s283 = sphi 0, %s269
      %s287 = sphi 0, %s287
      %s289 = sphi 0, %s287
      %s290 = sphi 0, %s289
      %s304 = sphi 0, %s290
      %s308 = sphi 0, %s308
      %s310 = sphi 0, %s308
      %s311 = sphi 0, %s310
      %s325 = sphi 0, %s311
      %s333 = sphi 0, %s335
      %s336 = sphi 0, %s333
      %s337 = sphi 0, %s336
      %s353 = sphi 0, %s337
    $region4: #{tpu_custom_call.1} parent=1 // loop_header_branch
      %34 = sbr.rel (%p32) target = $region8
    $region5: #{tpu_custom_call.1} parent=1 // loop_body
      %s36 = ssub.s32 %s31, 1
      %s37 = ssub.s32 %s31, 2
      %s44 = sadd.s32 1, %s39
      %p45 = scmp.ge.s32.totalorder %s44, 1
      %s46 = scalar_select %p45, 0, %s44
      %s47 = sadd.s32 1, %s38
      %s48 = scalar_select %p45, %s47, %s38
      %p49 = scmp.ge.s32.totalorder %s48, 2
      %s50 = scalar_select %p49, 0, %s48
      %s51 = ssub.s32 %s38, %s50
      %p52 = scmp.eq.s32.totalorder %s51, 0
      %s54 = sadd.s32 %s53, 1
      %s55 = scalar_select %p52, %s53, %s54
      %p58 = pneg %p52
      %p59 = scmp.eq.s32.totalorder %s31, 1
      %p60 = por %p58, %p59
      %p61 = scmp.ne.s32.totalorder %s53, %s56
      %p62 = scmp.eq.s32.totalorder %s31, 0
      %p63 = por %p61, %p62
      %p64 = scmp.ne.s32.totalorder %s53, %s56
      %p65 = scmp.eq.s32.totalorder %s36, 1
      %p66 = por %p64, %p65
      %p67 = scmp.ne.s32.totalorder %s56, %s57
      %p68 = scmp.eq.s32.totalorder %s36, 0
      %p69 = por %p67, %p68
      %p70 = scmp.ne.s32.totalorder %s56, %s57
      %p71 = scmp.eq.s32.totalorder %s37, 1
      %p72 = por %p70, %p71
      %p74 = scmp.ne.s32.totalorder %s57, %s73
      %p75 = scmp.eq.s32.totalorder %s37, 0
      %p76 = por %p74, %p75
      %s78 = sadd.s32 %s77, 1
      %p81 = scmp.eq.s32.totalorder %s31, 1
      %p82 = scmp.ne.s32.totalorder %s77, %s79
      %p83 = scmp.eq.s32.totalorder %s31, 0
      %p84 = por %p82, %p83
      %p85 = scmp.ne.s32.totalorder %s77, %s79
      %p86 = scmp.eq.s32.totalorder %s36, 1
      %p87 = por %p85, %p86
      %p88 = scmp.ne.s32.totalorder %s79, %s80
      %p89 = scmp.eq.s32.totalorder %s36, 0
      %p90 = por %p88, %p89
      %p91 = scmp.ne.s32.totalorder %s79, %s80
      %p92 = scmp.eq.s32.totalorder %s37, 1
      %p93 = por %p91, %p92
      %p95 = scmp.ne.s32.totalorder %s80, %s94
      %p96 = scmp.eq.s32.totalorder %s37, 0
      %p97 = por %p95, %p96
      %s99 = sadd.s32 %s98, 1
      %p102 = scmp.eq.s32.totalorder %s31, 1
      %p103 = scmp.ne.s32.totalorder %s98, %s100
      %p104 = scmp.eq.s32.totalorder %s31, 0
      %p105 = por %p103, %p104
      %p106 = scmp.ne.s32.totalorder %s98, %s100
      %p107 = scmp.eq.s32.totalorder %s36, 1
      %p108 = por %p106, %p107
      %p109 = scmp.ne.s32.totalorder %s100, %s101
      %p110 = scmp.eq.s32.totalorder %s36, 0
      %p111 = por %p109, %p110
      %p112 = scmp.ne.s32.totalorder %s100, %s101
      %p113 = scmp.eq.s32.totalorder %s37, 1
      %p114 = por %p112, %p113
      %p116 = scmp.ne.s32.totalorder %s101, %s115
      %p117 = scmp.eq.s32.totalorder %s37, 0
      %p118 = por %p116, %p117
      %s120 = sadd.s32 %s119, 1
      %p123 = scmp.eq.s32.totalorder %s31, 1
      %p124 = scmp.ne.s32.totalorder %s119, %s121
      %p125 = scmp.eq.s32.totalorder %s31, 0
      %p126 = por %p124, %p125
      %p127 = scmp.ne.s32.totalorder %s119, %s121
      %p128 = scmp.eq.s32.totalorder %s36, 1
      %p129 = por %p127, %p128
      %p130 = scmp.ne.s32.totalorder %s121, %s122
      %p131 = scmp.eq.s32.totalorder %s36, 0
      %p132 = por %p130, %p131
      %p133 = scmp.ne.s32.totalorder %s121, %s122
      %p134 = scmp.eq.s32.totalorder %s37, 1
      %p135 = por %p133, %p134
      %p137 = scmp.ne.s32.totalorder %s122, %s136
      %p138 = scmp.eq.s32.totalorder %s37, 0
      %p139 = por %p137, %p138
      %s141 = sadd.s32 %s140, 1
      %p144 = scmp.eq.s32.totalorder %s31, 1
      %p145 = scmp.ne.s32.totalorder %s140, %s142
      %p146 = scmp.eq.s32.totalorder %s31, 0
      %p147 = por %p145, %p146
      %p148 = scmp.ne.s32.totalorder %s140, %s142
      %p149 = scmp.eq.s32.totalorder %s36, 1
      %p150 = por %p148, %p149
      %p151 = scmp.ne.s32.totalorder %s142, %s143
      %p152 = scmp.eq.s32.totalorder %s36, 0
      %p153 = por %p151, %p152
      %p154 = scmp.ne.s32.totalorder %s142, %s143
      %p155 = scmp.eq.s32.totalorder %s37, 1
      %p156 = por %p154, %p155
      %p158 = scmp.ne.s32.totalorder %s143, %s157
      %p159 = scmp.eq.s32.totalorder %s37, 0
      %p160 = por %p158, %p159
      %s162 = sadd.s32 %s161, 1
      %p165 = scmp.eq.s32.totalorder %s31, 1
      %p166 = scmp.ne.s32.totalorder %s161, %s163
      %p167 = scmp.eq.s32.totalorder %s31, 0
      %p168 = por %p166, %p167
      %p169 = scmp.ne.s32.totalorder %s161, %s163
      %p170 = scmp.eq.s32.totalorder %s36, 1
      %p171 = por %p169, %p170
      %p172 = scmp.ne.s32.totalorder %s163, %s164
      %p173 = scmp.eq.s32.totalorder %s36, 0
      %p174 = por %p172, %p173
      %p175 = scmp.ne.s32.totalorder %s163, %s164
      %p176 = scmp.eq.s32.totalorder %s37, 1
      %p177 = por %p175, %p176
      %p179 = scmp.ne.s32.totalorder %s164, %s178
      %p180 = scmp.eq.s32.totalorder %s37, 0
      %p181 = por %p179, %p180
      %s183 = sadd.s32 %s182, 1
      %p186 = scmp.eq.s32.totalorder %s31, 1
      %p187 = scmp.ne.s32.totalorder %s182, %s184
      %p188 = scmp.eq.s32.totalorder %s31, 0
      %p189 = por %p187, %p188
      %p190 = scmp.ne.s32.totalorder %s182, %s184
      %p191 = scmp.eq.s32.totalorder %s36, 1
      %p192 = por %p190, %p191
      %p193 = scmp.ne.s32.totalorder %s184, %s185
      %p194 = scmp.eq.s32.totalorder %s36, 0
      %p195 = por %p193, %p194
      %p196 = scmp.ne.s32.totalorder %s184, %s185
      %p197 = scmp.eq.s32.totalorder %s37, 1
      %p198 = por %p196, %p197
      %p200 = scmp.ne.s32.totalorder %s185, %s199
      %p201 = scmp.eq.s32.totalorder %s37, 0
      %p202 = por %p200, %p201
      %s204 = sadd.s32 %s203, 1
      %p207 = scmp.eq.s32.totalorder %s31, 1
      %p208 = scmp.ne.s32.totalorder %s203, %s205
      %p209 = scmp.eq.s32.totalorder %s31, 0
      %p210 = por %p208, %p209
      %p211 = scmp.ne.s32.totalorder %s203, %s205
      %p212 = scmp.eq.s32.totalorder %s36, 1
      %p213 = por %p211, %p212
      %p214 = scmp.ne.s32.totalorder %s205, %s206
      %p215 = scmp.eq.s32.totalorder %s36, 0
      %p216 = por %p214, %p215
      %p217 = scmp.ne.s32.totalorder %s205, %s206
      %p218 = scmp.eq.s32.totalorder %s37, 1
      %p219 = por %p217, %p218
      %p221 = scmp.ne.s32.totalorder %s206, %s220
      %p222 = scmp.eq.s32.totalorder %s37, 0
      %p223 = por %p221, %p222
      %s225 = sadd.s32 %s224, 1
      %p228 = scmp.eq.s32.totalorder %s31, 1
      %p229 = scmp.ne.s32.totalorder %s224, %s226
      %p230 = scmp.eq.s32.totalorder %s31, 0
      %p231 = por %p229, %p230
      %p232 = scmp.ne.s32.totalorder %s224, %s226
      %p233 = scmp.eq.s32.totalorder %s36, 1
      %p234 = por %p232, %p233
      %p235 = scmp.ne.s32.totalorder %s226, %s227
      %p236 = scmp.eq.s32.totalorder %s36, 0
      %p237 = por %p235, %p236
      %p238 = scmp.ne.s32.totalorder %s226, %s227
      %p239 = scmp.eq.s32.totalorder %s37, 1
      %p240 = por %p238, %p239
      %p242 = scmp.ne.s32.totalorder %s227, %s241
      %p243 = scmp.eq.s32.totalorder %s37, 0
      %p244 = por %p242, %p243
      %s246 = sadd.s32 %s245, 1
      %p249 = scmp.eq.s32.totalorder %s31, 1
      %p250 = scmp.ne.s32.totalorder %s245, %s247
      %p251 = scmp.eq.s32.totalorder %s31, 0
      %p252 = por %p250, %p251
      %p253 = scmp.ne.s32.totalorder %s245, %s247
      %p254 = scmp.eq.s32.totalorder %s36, 1
      %p255 = por %p253, %p254
      %p256 = scmp.ne.s32.totalorder %s247, %s248
      %p257 = scmp.eq.s32.totalorder %s36, 0
      %p258 = por %p256, %p257
      %p259 = scmp.ne.s32.totalorder %s247, %s248
      %p260 = scmp.eq.s32.totalorder %s37, 1
      %p261 = por %p259, %p260
      %p263 = scmp.ne.s32.totalorder %s248, %s262
      %p264 = scmp.eq.s32.totalorder %s37, 0
      %p265 = por %p263, %p264
      %s267 = sadd.s32 %s266, 1
      %p270 = scmp.eq.s32.totalorder %s31, 1
      %p271 = scmp.ne.s32.totalorder %s266, %s268
      %p272 = scmp.eq.s32.totalorder %s31, 0
      %p273 = por %p271, %p272
      %p274 = scmp.ne.s32.totalorder %s266, %s268
      %p275 = scmp.eq.s32.totalorder %s36, 1
      %p276 = por %p274, %p275
      %p277 = scmp.ne.s32.totalorder %s268, %s269
      %p278 = scmp.eq.s32.totalorder %s36, 0
      %p279 = por %p277, %p278
      %p280 = scmp.ne.s32.totalorder %s268, %s269
      %p281 = scmp.eq.s32.totalorder %s37, 1
      %p282 = por %p280, %p281
      %p284 = scmp.ne.s32.totalorder %s269, %s283
      %p285 = scmp.eq.s32.totalorder %s37, 0
      %p286 = por %p284, %p285
      %s288 = sadd.s32 %s287, 1
      %p291 = scmp.eq.s32.totalorder %s31, 1
      %p292 = scmp.ne.s32.totalorder %s287, %s289
      %p293 = scmp.eq.s32.totalorder %s31, 0
      %p294 = por %p292, %p293
      %p295 = scmp.ne.s32.totalorder %s287, %s289
      %p296 = scmp.eq.s32.totalorder %s36, 1
      %p297 = por %p295, %p296
      %p298 = scmp.ne.s32.totalorder %s289, %s290
      %p299 = scmp.eq.s32.totalorder %s36, 0
      %p300 = por %p298, %p299
      %p301 = scmp.ne.s32.totalorder %s289, %s290
      %p302 = scmp.eq.s32.totalorder %s37, 1
      %p303 = por %p301, %p302
      %p305 = scmp.ne.s32.totalorder %s290, %s304
      %p306 = scmp.eq.s32.totalorder %s37, 0
      %p307 = por %p305, %p306
      %s309 = sadd.s32 %s308, 1
      %p312 = scmp.eq.s32.totalorder %s31, 1
      %p313 = scmp.ne.s32.totalorder %s308, %s310
      %p314 = scmp.eq.s32.totalorder %s31, 0
      %p315 = por %p313, %p314
      %p316 = scmp.ne.s32.totalorder %s308, %s310
      %p317 = scmp.eq.s32.totalorder %s36, 1
      %p318 = por %p316, %p317
      %p319 = scmp.ne.s32.totalorder %s310, %s311
      %p320 = scmp.eq.s32.totalorder %s36, 0
      %p321 = por %p319, %p320
      %p322 = scmp.ne.s32.totalorder %s310, %s311
      %p323 = scmp.eq.s32.totalorder %s37, 1
      %p324 = por %p322, %p323
      %p326 = scmp.ne.s32.totalorder %s311, %s325
      %p327 = scmp.eq.s32.totalorder %s37, 0
      %p328 = por %p326, %p327
      %s329 = ssub.s32 %s38, %s50
      %s330 = ssub.s32 %s39, %s46
      %s331 = sor.u32 %s329, %s330
      %p332 = scmp.eq.s32.totalorder %s331, 0
      %s334 = sadd.s32 %s333, 1
      %s335 = scalar_select %p332, %s333, %s334
      %p338 = pneg %p332
      %p339 = scmp.eq.s32.totalorder %s31, 1
      %p340 = por %p338, %p339
      %p341 = scmp.ne.s32.totalorder %s333, %s336
      %p342 = scmp.eq.s32.totalorder %s31, 0
      %p343 = por %p341, %p342
      %p344 = scmp.ne.s32.totalorder %s333, %s336
      %p345 = scmp.eq.s32.totalorder %s36, 1
      %p346 = por %p344, %p345
      %p347 = scmp.ne.s32.totalorder %s336, %s337
      %p348 = scmp.eq.s32.totalorder %s36, 0
      %p349 = por %p347, %p348
      %p350 = scmp.ne.s32.totalorder %s336, %s337
      %p351 = scmp.eq.s32.totalorder %s37, 1
      %p352 = por %p350, %p351
      %p354 = scmp.ne.s32.totalorder %s337, %s353
      %p355 = scmp.eq.s32.totalorder %s37, 0
      %p356 = por %p354, %p355
      %p357 = scmp.le.s32.totalorder 1, %s31
      %p358 = scmp.lt.s32.totalorder %s31, 3
      %p359 = pnand %p357, %p358
      %p360 = pneg %p359
      // Predicated region
      $region9: #{tpu_custom_call.1} parent=5 // pred_check
        _
      $region10: #{tpu_custom_call.1} parent=5 // pred_check_branch
        %362 = sbr.rel (%p359) target = $region12
      $region11: #{tpu_custom_call.1} parent=5 // pred_region
        %s363 = ssub.s32 %s31, 1
        // Predicated region
        $region13: #{tpu_custom_call.1} parent=11 // pred_check
          %p364 = pneg %p90
        $region14: #{tpu_custom_call.1} parent=11 // pred_check_branch
          %366 = sbr.rel (%p364) target = $region16
        $region15: #{tpu_custom_call.1} parent=11 // pred_region
          %s368 = ssub.s32 256, 256
          %369 = vsyncadd [#allocation6], %s368
          %s370 = sshll.u32 [#allocation5], 4
          %s371 = int_to_ptr.vmem [resolvable:$true] %s370
          %376 = dma.hbm_to_vmem [thread:$0]  %s1, 256, %s371, [#allocation6], 64, 64, 4
        $region16: #{tpu_custom_call.1} parent=11 // pred_fallthru
          _
        // Predicated region
        $region17: #{tpu_custom_call.1} parent=11 // pred_check
          %p377 = pneg %p111
        $region18: #{tpu_custom_call.1} parent=11 // pred_check_branch
          %379 = sbr.rel (%p377) target = $region20
        $region19: #{tpu_custom_call.1} parent=11 // pred_region
          %s381 = ssub.s32 256, 256
          %382 = vsyncadd [#allocation6], %s381
          %s383 = sshll.u32 [#allocation7], 4
          %s384 = int_to_ptr.vmem [resolvable:$true] %s383
          %389 = dma.hbm_to_vmem [thread:$0]  %s2, 256, %s384, [#allocation6], 64, 64, 4
        $region20: #{tpu_custom_call.1} parent=11 // pred_fallthru
          _
        // Predicated region
        $region21: #{tpu_custom_call.1} parent=11 // pred_check
          %p390 = pneg %p132
        $region22: #{tpu_custom_call.1} parent=11 // pred_check_branch
          %392 = sbr.rel (%p390) target = $region24
        $region23: #{tpu_custom_call.1} parent=11 // pred_region
          %s394 = ssub.s32 256, 256
          %395 = vsyncadd [#allocation9], %s394
          %s396 = sshll.u32 [#allocation8], 4
          %s397 = int_to_ptr.vmem [resolvable:$true] %s396
          %402 = dma.hbm_to_vmem [thread:$0]  %s3, 256, %s397, [#allocation9], 64, 64, 4
        $region24: #{tpu_custom_call.1} parent=11 // pred_fallthru
          _
        // Predicated region
        $region25: #{tpu_custom_call.1} parent=11 // pred_check
          %p403 = pneg %p153
        $region26: #{tpu_custom_call.1} parent=11 // pred_check_branch
          %405 = sbr.rel (%p403) target = $region28
        $region27: #{tpu_custom_call.1} parent=11 // pred_region
          %s407 = ssub.s32 256, 256
          %408 = vsyncadd [#allocation9], %s407
          %s409 = sshll.u32 [#allocation10], 4
          %s410 = int_to_ptr.vmem [resolvable:$true] %s409
          %415 = dma.hbm_to_vmem [thread:$0]  %s4, 256, %s410, [#allocation9], 64, 64, 4
        $region28: #{tpu_custom_call.1} parent=11 // pred_fallthru
          _
        // Predicated region
        $region29: #{tpu_custom_call.1} parent=11 // pred_check
          %p416 = pneg %p174
        $region30: #{tpu_custom_call.1} parent=11 // pred_check_branch
          %418 = sbr.rel (%p416) target = $region32
        $region31: #{tpu_custom_call.1} parent=11 // pred_region
          %s420 = ssub.s32 16, 16
          %421 = vsyncadd [#allocation12], %s420
          %s423 = sshll.u32 [#allocation11], 4
          %s424 = int_to_ptr.vmem [resolvable:$true] %s423
          %426 = dma.hbm_to_vmem [thread:$0]  %s5, 16, %s424, [#allocation12]
        $region32: #{tpu_custom_call.1} parent=11 // pred_fallthru
          _
        // Predicated region
        $region33: #{tpu_custom_call.1} parent=11 // pred_check
          %p427 = pneg %p195
        $region34: #{tpu_custom_call.1} parent=11 // pred_check_branch
          %429 = sbr.rel (%p427) target = $region36
        $region35: #{tpu_custom_call.1} parent=11 // pred_region
          %s431 = ssub.s32 16, 16
          %432 = vsyncadd [#allocation12], %s431
          %s434 = sshll.u32 [#allocation13], 4
          %s435 = int_to_ptr.vmem [resolvable:$true] %s434
          %437 = dma.hbm_to_vmem [thread:$0]  %s6, 16, %s435, [#allocation12]
        $region36: #{tpu_custom_call.1} parent=11 // pred_fallthru
          _
        // Predicated region
        $region37: #{tpu_custom_call.1} parent=11 // pred_check
          %p438 = pneg %p216
        $region38: #{tpu_custom_call.1} parent=11 // pred_check_branch
          %440 = sbr.rel (%p438) target = $region40
        $region39: #{tpu_custom_call.1} parent=11 // pred_region
          %s442 = ssub.s32 256, 256
          %443 = vsyncadd [#allocation15], %s442
          %s444 = sshll.u32 [#allocation14], 4
          %s445 = int_to_ptr.vmem [resolvable:$true] %s444
          %450 = dma.hbm_to_vmem [thread:$0]  %s7, 256, %s445, [#allocation15], 64, 64, 4
        $region40: #{tpu_custom_call.1} parent=11 // pred_fallthru
          _
        // Predicated region
        $region41: #{tpu_custom_call.1} parent=11 // pred_check
          %p451 = pneg %p237
        $region42: #{tpu_custom_call.1} parent=11 // pred_check_branch
          %453 = sbr.rel (%p451) target = $region44
        $region43: #{tpu_custom_call.1} parent=11 // pred_region
          %s455 = ssub.s32 16, 16
          %456 = vsyncadd [#allocation15], %s455
          %s458 = sshll.u32 [#allocation16], 4
          %s459 = int_to_ptr.vmem [resolvable:$true] %s458
          %461 = dma.hbm_to_vmem [thread:$0]  %s8, 16, %s459, [#allocation15]
        $region44: #{tpu_custom_call.1} parent=11 // pred_fallthru
          _
        // Predicated region
        $region45: #{tpu_custom_call.1} parent=11 // pred_check
          %p462 = pneg %p258
        $region46: #{tpu_custom_call.1} parent=11 // pred_check_branch
          %464 = sbr.rel (%p462) target = $region48
        $region47: #{tpu_custom_call.1} parent=11 // pred_region
          %s466 = ssub.s32 256, 256
          %467 = vsyncadd [#allocation18], %s466
          %s468 = sshll.u32 [#allocation17], 4
          %s469 = int_to_ptr.vmem [resolvable:$true] %s468
          %474 = dma.hbm_to_vmem [thread:$0]  %s9, 256, %s469, [#allocation18], 64, 64, 4
        $region48: #{tpu_custom_call.1} parent=11 // pred_fallthru
          _
        // Predicated region
        $region49: #{tpu_custom_call.1} parent=11 // pred_check
          %p475 = pneg %p279
        $region50: #{tpu_custom_call.1} parent=11 // pred_check_branch
          %477 = sbr.rel (%p475) target = $region52
        $region51: #{tpu_custom_call.1} parent=11 // pred_region
          %s479 = ssub.s32 16, 16
          %480 = vsyncadd [#allocation18], %s479
          %s482 = sshll.u32 [#allocation19], 4
          %s483 = int_to_ptr.vmem [resolvable:$true] %s482
          %485 = dma.hbm_to_vmem [thread:$0]  %s10, 16, %s483, [#allocation18]
        $region52: #{tpu_custom_call.1} parent=11 // pred_fallthru
          _
        // Predicated region
        $region53: #{tpu_custom_call.1} parent=11 // pred_check
          %p486 = pneg %p300
        $region54: #{tpu_custom_call.1} parent=11 // pred_check_branch
          %488 = sbr.rel (%p486) target = $region56
        $region55: #{tpu_custom_call.1} parent=11 // pred_region
          %s490 = ssub.s32 16, 16
          %491 = vsyncadd [#allocation21], %s490
          %s493 = sshll.u32 [#allocation20], 4
          %s494 = int_to_ptr.vmem [resolvable:$true] %s493
          %496 = dma.hbm_to_vmem [thread:$0]  %s11, 16, %s494, [#allocation21]
        $region56: #{tpu_custom_call.1} parent=11 // pred_fallthru
          _
        // Predicated region
        $region57: #{tpu_custom_call.1} parent=11 // pred_check
          %p497 = pneg %p321
        $region58: #{tpu_custom_call.1} parent=11 // pred_check_branch
          %499 = sbr.rel (%p497) target = $region60
        $region59: #{tpu_custom_call.1} parent=11 // pred_region
          %s501 = ssub.s32 16, 16
          %502 = vsyncadd [#allocation21], %s501
          %s504 = sshll.u32 [#allocation22], 4
          %s505 = int_to_ptr.vmem [resolvable:$true] %s504
          %507 = dma.hbm_to_vmem [thread:$0]  %s12, 16, %s505, [#allocation21]
        $region60: #{tpu_custom_call.1} parent=11 // pred_fallthru
          _
      $region12: #{tpu_custom_call.1} parent=5 // pred_fallthru
        _
      %p508 = scmp.lt.s32.totalorder %s31, 2
      // Predicated region
      $region61: #{tpu_custom_call.1} parent=5 // pred_check
        %p509 = pneg %p508
      $region62: #{tpu_custom_call.1} parent=5 // pred_check_branch
        %511 = sbr.rel (%p509) target = $region64
      $region63: #{tpu_custom_call.1} parent=5 // pred_region
        // Predicated region
        $region65: #{tpu_custom_call.1} parent=63 // pred_check
          %p512 = pneg %p63
        $region66: #{tpu_custom_call.1} parent=63 // pred_check_branch
          %514 = sbr.rel (%p512) target = $region68
        $region67: #{tpu_custom_call.1} parent=63 // pred_region
          %s515 = sand.u32 %s53, 1
          %s516 = scalar_lea.sflag [#allocation3], %s515
          %s517 = sand.u32 %s53, 1
          %s518 = smul.addr %s517, 8
          %s519 = scalar_lea.vmem [#allocation2], %s518
          %s521 = ssub.s32 128, 128
          %522 = vsyncadd %s516, %s521
          %s523 = smul.addr %s38, 128
          %s524 = scalar_lea.hbm %s0, %s523
          %s526 = sshll.u32 %s519, 4
          %s527 = int_to_ptr.vmem [resolvable:$true] %s526
          %529 = dma.hbm_to_vmem [thread:$0]  %s524, 128, %s527, %s516
        $region68: #{tpu_custom_call.1} parent=63 // pred_fallthru
          _
      $region64: #{tpu_custom_call.1} parent=5 // pred_fallthru
        _
      %p530 = scmp.le.s32.totalorder 1, %s31
      %p531 = scmp.lt.s32.totalorder %s31, 3
      %p532 = pnand %p530, %p531
      %p533 = pneg %p532
      // Predicated region
      $region69: #{tpu_custom_call.1} parent=5 // pred_check
        _
      $region70: #{tpu_custom_call.1} parent=5 // pred_check_branch
        %535 = sbr.rel (%p532) target = $region72
      $region71: #{tpu_custom_call.1} parent=5 // pred_region
        %s536 = ssub.s32 %s31, 1
        %s537 = sand.u32 %s56, 1
        %s538 = scalar_lea.sflag [#allocation3], %s537
        %s539 = sand.u32 %s56, 1
        %s540 = smul.addr %s539, 8
        %s541 = scalar_lea.vmem [#allocation2], %s540
        // Predicated region
        $region73: #{tpu_custom_call.1} parent=71 // pred_check
          %p542 = pneg %p69
        $region74: #{tpu_custom_call.1} parent=71 // pred_check_branch
          %544 = sbr.rel (%p542) target = $region76
        $region75: #{tpu_custom_call.1} parent=71 // pred_region
          %545 = dma.done %s538, 128
        $region76: #{tpu_custom_call.1} parent=71 // pred_fallthru
          _
        // Predicated region
        $region77: #{tpu_custom_call.1} parent=71 // pred_check
          %p546 = pneg %p90
        $region78: #{tpu_custom_call.1} parent=71 // pred_check_branch
          %548 = sbr.rel (%p546) target = $region80
        $region79: #{tpu_custom_call.1} parent=71 // pred_region
          %549 = dma.done [#allocation6], 256
        $region80: #{tpu_custom_call.1} parent=71 // pred_fallthru
          _
        // Predicated region
        $region81: #{tpu_custom_call.1} parent=71 // pred_check
          %p550 = pneg %p111
        $region82: #{tpu_custom_call.1} parent=71 // pred_check_branch
          %552 = sbr.rel (%p550) target = $region84
        $region83: #{tpu_custom_call.1} parent=71 // pred_region
          %553 = dma.done [#allocation6], 256
        $region84: #{tpu_custom_call.1} parent=71 // pred_fallthru
          _
        // Predicated region
        $region85: #{tpu_custom_call.1} parent=71 // pred_check
          %p554 = pneg %p132
        $region86: #{tpu_custom_call.1} parent=71 // pred_check_branch
          %556 = sbr.rel (%p554) target = $region88
        $region87: #{tpu_custom_call.1} parent=71 // pred_region
          %557 = dma.done [#allocation9], 256
        $region88: #{tpu_custom_call.1} parent=71 // pred_fallthru
          _
        // Predicated region
        $region89: #{tpu_custom_call.1} parent=71 // pred_check
          %p558 = pneg %p153
        $region90: #{tpu_custom_call.1} parent=71 // pred_check_branch
          %560 = sbr.rel (%p558) target = $region92
        $region91: #{tpu_custom_call.1} parent=71 // pred_region
          %561 = dma.done [#allocation9], 256
        $region92: #{tpu_custom_call.1} parent=71 // pred_fallthru
          _
        // Predicated region
        $region93: #{tpu_custom_call.1} parent=71 // pred_check
          %p562 = pneg %p174
        $region94: #{tpu_custom_call.1} parent=71 // pred_check_branch
          %564 = sbr.rel (%p562) target = $region96
        $region95: #{tpu_custom_call.1} parent=71 // pred_region
          %565 = dma.done [#allocation12], 16
        $region96: #{tpu_custom_call.1} parent=71 // pred_fallthru
          _
        // Predicated region
        $region97: #{tpu_custom_call.1} parent=71 // pred_check
          %p566 = pneg %p195
        $region98: #{tpu_custom_call.1} parent=71 // pred_check_branch
          %568 = sbr.rel (%p566) target = $region100
        $region99: #{tpu_custom_call.1} parent=71 // pred_region
          %569 = dma.done [#allocation12], 16
        $region100: #{tpu_custom_call.1} parent=71 // pred_fallthru
          _
        // Predicated region
        $region101: #{tpu_custom_call.1} parent=71 // pred_check
          %p570 = pneg %p216
        $region102: #{tpu_custom_call.1} parent=71 // pred_check_branch
          %572 = sbr.rel (%p570) target = $region104
        $region103: #{tpu_custom_call.1} parent=71 // pred_region
          %573 = dma.done [#allocation15], 256
        $region104: #{tpu_custom_call.1} parent=71 // pred_fallthru
          _
        // Predicated region
        $region105: #{tpu_custom_call.1} parent=71 // pred_check
          %p574 = pneg %p237
        $region106: #{tpu_custom_call.1} parent=71 // pred_check_branch
          %576 = sbr.rel (%p574) target = $region108
        $region107: #{tpu_custom_call.1} parent=71 // pred_region
          %577 = dma.done [#allocation15], 16
        $region108: #{tpu_custom_call.1} parent=71 // pred_fallthru
          _
        // Predicated region
        $region109: #{tpu_custom_call.1} parent=71 // pred_check
          %p578 = pneg %p258
        $region110: #{tpu_custom_call.1} parent=71 // pred_check_branch
          %580 = sbr.rel (%p578) target = $region112
        $region111: #{tpu_custom_call.1} parent=71 // pred_region
          %581 = dma.done [#allocation18], 256
        $region112: #{tpu_custom_call.1} parent=71 // pred_fallthru
          _
        // Predicated region
        $region113: #{tpu_custom_call.1} parent=71 // pred_check
          %p582 = pneg %p279
        $region114: #{tpu_custom_call.1} parent=71 // pred_check_branch
          %584 = sbr.rel (%p582) target = $region116
        $region115: #{tpu_custom_call.1} parent=71 // pred_region
          %585 = dma.done [#allocation18], 16
        $region116: #{tpu_custom_call.1} parent=71 // pred_fallthru
          _
        // Predicated region
        $region117: #{tpu_custom_call.1} parent=71 // pred_check
          %p586 = pneg %p300
        $region118: #{tpu_custom_call.1} parent=71 // pred_check_branch
          %588 = sbr.rel (%p586) target = $region120
        $region119: #{tpu_custom_call.1} parent=71 // pred_region
          %589 = dma.done [#allocation21], 16
        $region120: #{tpu_custom_call.1} parent=71 // pred_fallthru
          _
        // Predicated region
        $region121: #{tpu_custom_call.1} parent=71 // pred_check
          %p590 = pneg %p321
        $region122: #{tpu_custom_call.1} parent=71 // pred_check_branch
          %592 = sbr.rel (%p590) target = $region124
        $region123: #{tpu_custom_call.1} parent=71 // pred_region
          %593 = dma.done [#allocation21], 16
        $region124: #{tpu_custom_call.1} parent=71 // pred_fallthru
          _
        %s594 = sand.u32 %s56, 1
        %s595 = scalar_lea.sflag [#allocation3], %s594
        %s596 = sand.u32 %s56, 1
        %s597 = smul.addr %s596, 8
        %s598 = scalar_lea.vmem [#allocation2], %s597
        %p599 = pneg %p69
        %p600 = pneg %p66
        %p601 = pneg %p90
        %p602 = pneg %p87
        %p603 = pneg %p111
        %p604 = pneg %p108
        %p605 = pneg %p132
        %p606 = pneg %p129
        %p607 = pneg %p153
        %p608 = pneg %p150
        %p609 = pneg %p174
        %p610 = pneg %p171
        %p611 = pneg %p195
        %p612 = pneg %p192
        %p613 = pneg %p216
        %p614 = pneg %p213
        %p615 = pneg %p237
        %p616 = pneg %p234
        %p617 = pneg %p258
        %p618 = pneg %p255
        %p619 = pneg %p279
        %p620 = pneg %p276
        %p621 = pneg %p300
        %p622 = pneg %p297
        %p623 = pneg %p321
        %p624 = pneg %p318
        %p625 = pneg %p349
        %p626 = pneg %p346
        %s627 = sand.u32 %s336, 1
        %s628 = scalar_lea.sflag [#allocation4], %s627
        %s629 = sand.u32 %s336, 1
        %s630 = smul.addr %s629, 8
        %s631 = scalar_lea.vmem [#allocation23], %s630
        %v633 = vld [vmem:[%s541] sm:$0xff]
        %v634 = vpack.c.bf16 %v633, %v633
        %v635 = vld [vmem:[#allocation5] sm:$0xf]
        %v636 = vld [vmem:[#allocation5 + $0x4] sm:$0xf]
        %v637 = vld [vmem:[#allocation5 + $0x8] sm:$0xf]
        %v638 = vld [vmem:[#allocation5 + $0xc] sm:$0xf]
        %v643 = vunpack.c.l.b16 %v635
        %v644 = vunpack.c.l.b16 %v636
        %v645 = vunpack.c.l.b16 %v637
        %v646 = vunpack.c.l.b16 %v638
        %v647 = vpack.c.b16 %v644, %v643
        %v648 = vpack.c.b16 %v646, %v645
        %vm651 = vcmask 261120
        %v653 = vsel %vm651, %v634, 0
        %655 = vmatprep.subr.bf16.mxu0 0
        %656 = vmatpush1.bf16.msra.mxu0 %v647
        %657 = vmatprep.subr.bf16.mxu0 0
        %658 = vmatpush1.bf16.msra.mxu0 %v648
        %659 = vmatprep.subr.bf16.mxu0 0
        %660 = vmatpush1.bf16.msra.mxu0 0
        %661 = vmatprep.subr.bf16.mxu0 0
        %662 = vmatpush1.bf16.msra.mxu0 0
        %663 = vmatprep.subr.bf16.mxu0 0
        %664 = vmatpush1.bf16.msra.mxu0 0
        %665 = vmatprep.subr.bf16.mxu0 0
        %666 = vmatpush1.bf16.msra.mxu0 0
        %667 = vmatprep.subr.bf16.mxu0 0
        %668 = vmatpush1.bf16.msra.mxu0 0
        %669 = vmatprep.subr.bf16.mxu0 0
        %670 = vmatpush1.bf16.msra.mxu0 0
        %671 = vmatprep.subr.bf16.mxu0 0
        %672 = vmatpush1.bf16.msra.mxu0 0
        %673 = vmatprep.subr.bf16.mxu0 0
        %674 = vmatpush1.bf16.msra.mxu0 0
        %675 = vmatprep.subr.bf16.mxu0 0
        %676 = vmatpush1.bf16.msra.mxu0 0
        %677 = vmatprep.subr.bf16.mxu0 0
        %678 = vmatpush1.bf16.msra.mxu0 0
        %679 = vmatprep.subr.bf16.mxu0 0
        %680 = vmatpush1.bf16.msra.mxu0 0
        %681 = vmatprep.subr.bf16.mxu0 0
        %682 = vmatpush1.bf16.msra.mxu0 0
        %683 = vmatprep.subr.bf16.mxu0 0
        %684 = vmatpush1.bf16.msra.mxu0 0
        %685 = vmatprep.subr.bf16.mxu0 0
        %686 = vmatpush1.bf16.msra.mxu0 0
        %687 = vmatprep.mubr.bf16.mxu0 0
        %688 = vmatmul.mubr.bf16.gmra.mrb[0].mxu0 %v653
        %v689 = vpop.f32.mrb[0].mxu0
        %v690 = vadd.f32 0.0, %v689
        %v691 = vpop.f32.mrb[0].mxu0
        %v692 = vpop.f32.mrb[0].mxu0
        %v693 = vpop.f32.mrb[0].mxu0
        %694 = vdwg.mxu0
        %v695 = vld [vmem:[#allocation7] sm:$0xf]
        %v696 = vld [vmem:[#allocation7 + $0x4] sm:$0xf]
        %v697 = vld [vmem:[#allocation7 + $0x8] sm:$0xf]
        %v698 = vld [vmem:[#allocation7 + $0xc] sm:$0xf]
        %v703 = vunpack.c.l.b16 %v695
        %v704 = vunpack.c.l.b16 %v696
        %v705 = vunpack.c.l.b16 %v697
        %v706 = vunpack.c.l.b16 %v698
        %v707 = vpack.c.b16 %v704, %v703
        %v708 = vpack.c.b16 %v706, %v705
        %711 = vmatprep.subr.bf16.mxu0 0
        %712 = vmatpush1.bf16.msra.mxu0 %v707
        %713 = vmatprep.subr.bf16.mxu0 0
        %714 = vmatpush1.bf16.msra.mxu0 %v708
        %715 = vmatprep.subr.bf16.mxu0 0
        %716 = vmatpush1.bf16.msra.mxu0 0
        %717 = vmatprep.subr.bf16.mxu0 0
        %718 = vmatpush1.bf16.msra.mxu0 0
        %719 = vmatprep.subr.bf16.mxu0 0
        %720 = vmatpush1.bf16.msra.mxu0 0
        %721 = vmatprep.subr.bf16.mxu0 0
        %722 = vmatpush1.bf16.msra.mxu0 0
        %723 = vmatprep.subr.bf16.mxu0 0
        %724 = vmatpush1.bf16.msra.mxu0 0
        %725 = vmatprep.subr.bf16.mxu0 0
        %726 = vmatpush1.bf16.msra.mxu0 0
        %727 = vmatprep.subr.bf16.mxu0 0
        %728 = vmatpush1.bf16.msra.mxu0 0
        %729 = vmatprep.subr.bf16.mxu0 0
        %730 = vmatpush1.bf16.msra.mxu0 0
        %731 = vmatprep.subr.bf16.mxu0 0
        %732 = vmatpush1.bf16.msra.mxu0 0
        %733 = vmatprep.subr.bf16.mxu0 0
        %734 = vmatpush1.bf16.msra.mxu0 0
        %735 = vmatprep.subr.bf16.mxu0 0
        %736 = vmatpush1.bf16.msra.mxu0 0
        %737 = vmatprep.subr.bf16.mxu0 0
        %738 = vmatpush1.bf16.msra.mxu0 0
        %739 = vmatprep.subr.bf16.mxu0 0
        %740 = vmatpush1.bf16.msra.mxu0 0
        %741 = vmatprep.subr.bf16.mxu0 0
        %742 = vmatpush1.bf16.msra.mxu0 0
        %743 = vmatprep.mubr.bf16.mxu0 0
        %744 = vmatmul.mubr.bf16.gmra.mrb[0].mxu0 %v653
        %v745 = vpop.f32.mrb[0].mxu0
        %v746 = vadd.f32 0.0, %v745
        %v747 = vpop.f32.mrb[0].mxu0
        %v748 = vpop.f32.mrb[0].mxu0
        %v749 = vpop.f32.mrb[0].mxu0
        %750 = vdwg.mxu0
        %v751 = vld [vmem:[#allocation8] sm:$0xf]
        %v752 = vld [vmem:[#allocation8 + $0x4] sm:$0xf]
        %v753 = vld [vmem:[#allocation8 + $0x8] sm:$0xf]
        %v754 = vld [vmem:[#allocation8 + $0xc] sm:$0xf]
        %v759 = vunpack.c.l.b16 %v751
        %v760 = vunpack.c.l.b16 %v752
        %v761 = vunpack.c.l.b16 %v753
        %v762 = vunpack.c.l.b16 %v754
        %v763 = vpack.c.b16 %v760, %v759
        %v764 = vpack.c.b16 %v762, %v761
        %767 = vmatprep.subr.bf16.mxu0 0
        %768 = vmatpush1.bf16.msra.mxu0 %v763
        %769 = vmatprep.subr.bf16.mxu0 0
        %770 = vmatpush1.bf16.msra.mxu0 %v764
        %771 = vmatprep.subr.bf16.mxu0 0
        %772 = vmatpush1.bf16.msra.mxu0 0
        %773 = vmatprep.subr.bf16.mxu0 0
        %774 = vmatpush1.bf16.msra.mxu0 0
        %775 = vmatprep.subr.bf16.mxu0 0
        %776 = vmatpush1.bf16.msra.mxu0 0
        %777 = vmatprep.subr.bf16.mxu0 0
        %778 = vmatpush1.bf16.msra.mxu0 0
        %779 = vmatprep.subr.bf16.mxu0 0
        %780 = vmatpush1.bf16.msra.mxu0 0
        %781 = vmatprep.subr.bf16.mxu0 0
        %782 = vmatpush1.bf16.msra.mxu0 0
        %783 = vmatprep.subr.bf16.mxu0 0
        %784 = vmatpush1.bf16.msra.mxu0 0
        %785 = vmatprep.subr.bf16.mxu0 0
        %786 = vmatpush1.bf16.msra.mxu0 0
        %787 = vmatprep.subr.bf16.mxu0 0
        %788 = vmatpush1.bf16.msra.mxu0 0
        %789 = vmatprep.subr.bf16.mxu0 0
        %790 = vmatpush1.bf16.msra.mxu0 0
        %791 = vmatprep.subr.bf16.mxu0 0
        %792 = vmatpush1.bf16.msra.mxu0 0
        %793 = vmatprep.subr.bf16.mxu0 0
        %794 = vmatpush1.bf16.msra.mxu0 0
        %795 = vmatprep.subr.bf16.mxu0 0
        %796 = vmatpush1.bf16.msra.mxu0 0
        %797 = vmatprep.subr.bf16.mxu0 0
        %798 = vmatpush1.bf16.msra.mxu0 0
        %799 = vmatprep.mubr.bf16.mxu0 0
        %800 = vmatmul.mubr.bf16.gmra.mrb[0].mxu0 %v653
        %v801 = vpop.f32.mrb[0].mxu0
        %v802 = vadd.f32 0.0, %v801
        %v803 = vpop.f32.mrb[0].mxu0
        %v804 = vpop.f32.mrb[0].mxu0
        %v805 = vpop.f32.mrb[0].mxu0
        %806 = vdwg.mxu0
        %808 = vrot.lane.b32.xlu0 %v690, 120
        %v809 = vpop.permute.xlu0 %808
        %811 = vrot.lane.b32.xlu0 %v690, 112
        %v812 = vpop.permute.xlu0 %811
        %814 = vrot.lane.b32.xlu0 %v690, 104
        %v815 = vpop.permute.xlu0 %814
        %v817 = vcombine.low %v690, %v812
        %v818 = vcombine.high %v690, %v812
        %v820 = vunpack.c.l.s4 1983009808
        %v821 = vunpack.c.0.s8 %v820
        %v822 = vlaneseq
        %v823 = vshrl.u32 %v822, 7
        %v824 = vsub.s32 %v821, %v823
        %v825 = vrot.slane %v817, %v824
        %v827 = vunpack.c.l.s4 1983009808
        %v828 = vunpack.c.0.s8 %v827
        %v829 = vlaneseq
        %v830 = vshrl.u32 %v829, 7
        %v831 = vsub.s32 %v828, %v830
        %v832 = vrot.slane %v818, %v831
        %v833 = vcombine.low %v809, %v815
        %v834 = vcombine.high %v809, %v815
        %v836 = vunpack.c.l.s4 1983009808
        %v837 = vunpack.c.0.s8 %v836
        %v838 = vlaneseq
        %v839 = vshrl.u32 %v838, 7
        %v840 = vsub.s32 %v837, %v839
        %v841 = vrot.slane %v833, %v840
        %v843 = vunpack.c.l.s4 1983009808
        %v844 = vunpack.c.0.s8 %v843
        %v845 = vlaneseq
        %v846 = vshrl.u32 %v845, 7
        %v847 = vsub.s32 %v844, %v846
        %v848 = vrot.slane %v834, %v847
        %v849 = vcombine.low %v825, %v841
        %v850 = vcombine.high %v825, %v841
        %v852 = vunpack.c.l.s4 1934713408
        %v853 = vunpack.c.0.s8 %v852
        %v854 = vlaneseq
        %v855 = vshrl.u32 %v854, 7
        %v856 = vsub.s32 %v853, %v855
        %v857 = vrot.slane %v849, %v856
        %v859 = vunpack.c.l.s4 1934713408
        %v860 = vunpack.c.0.s8 %v859
        %v861 = vlaneseq
        %v862 = vshrl.u32 %v861, 7
        %v863 = vsub.s32 %v860, %v862
        %v864 = vrot.slane %v850, %v863
        %v865 = vcombine.low %v832, %v848
        %v866 = vcombine.high %v832, %v848
        %v868 = vunpack.c.l.s4 1934713408
        %v869 = vunpack.c.0.s8 %v868
        %v870 = vlaneseq
        %v871 = vshrl.u32 %v870, 7
        %v872 = vsub.s32 %v869, %v871
        %v873 = vrot.slane %v865, %v872
        %v875 = vunpack.c.l.s4 1934713408
        %v876 = vunpack.c.0.s8 %v875
        %v877 = vlaneseq
        %v878 = vshrl.u32 %v877, 7
        %v879 = vsub.s32 %v876, %v878
        %v880 = vrot.slane %v866, %v879
        %v881 = vcombine.high %v857, 0.0
        %v882 = vcombine.high %v864, 0.0
        %v883 = vcombine.high %v873, 0.0
        %v884 = vcombine.high %v880, 0.0
        %v885 = vcombine.low %v857, %v864
        %v887 = vunpack.c.l.s4 1983009808
        %v888 = vunpack.c.0.s8 %v887
        %v889 = vlaneseq
        %v890 = vshrl.u32 %v889, 7
        %v891 = vsub.s32 %v888, %v890
        %v892 = vrot.slane %v885, %v891
        %v893 = vcombine.low %v881, %v882
        %v895 = vunpack.c.l.s4 1983009808
        %v896 = vunpack.c.0.s8 %v895
        %v897 = vlaneseq
        %v898 = vshrl.u32 %v897, 7
        %v899 = vsub.s32 %v896, %v898
        %v900 = vrot.slane %v893, %v899
        %v901 = vcombine.low %v873, %v880
        %v903 = vunpack.c.l.s4 1983009808
        %v904 = vunpack.c.0.s8 %v903
        %v905 = vlaneseq
        %v906 = vshrl.u32 %v905, 7
        %v907 = vsub.s32 %v904, %v906
        %v908 = vrot.slane %v901, %v907
        %v909 = vcombine.low %v883, %v884
        %v911 = vunpack.c.l.s4 1983009808
        %v912 = vunpack.c.0.s8 %v911
        %v913 = vlaneseq
        %v914 = vshrl.u32 %v913, 7
        %v915 = vsub.s32 %v912, %v914
        %v916 = vrot.slane %v909, %v915
        %v917 = vcombine.low %v892, %v900
        %v918 = vcombine.high %v892, %v900
        %v920 = vunpack.c.l.s4 1934713408
        %v921 = vunpack.c.0.s8 %v920
        %v922 = vlaneseq
        %v923 = vshrl.u32 %v922, 7
        %v924 = vsub.s32 %v921, %v923
        %v925 = vrot.slane %v917, %v924
        %v927 = vunpack.c.l.s4 1934713408
        %v928 = vunpack.c.0.s8 %v927
        %v929 = vlaneseq
        %v930 = vshrl.u32 %v929, 7
        %v931 = vsub.s32 %v928, %v930
        %v932 = vrot.slane %v918, %v931
        %v933 = vcombine.low %v908, %v916
        %v934 = vcombine.high %v908, %v916
        %v936 = vunpack.c.l.s4 1934713408
        %v937 = vunpack.c.0.s8 %v936
        %v938 = vlaneseq
        %v939 = vshrl.u32 %v938, 7
        %v940 = vsub.s32 %v937, %v939
        %v941 = vrot.slane %v933, %v940
        %v943 = vunpack.c.l.s4 1934713408
        %v944 = vunpack.c.0.s8 %v943
        %v945 = vlaneseq
        %v946 = vshrl.u32 %v945, 7
        %v947 = vsub.s32 %v944, %v946
        %v948 = vrot.slane %v934, %v947
        %v949 = vcombine.low %v925, %v941
        %v950 = vcombine.high %v925, %v941
        %v951 = vcombine.low %v932, %v948
        %v952 = vcombine.high %v932, %v948
        %v953 = vpack.c.bf16 %v949, %v949
        %v954 = vpack.c.bf16 %v950, %v950
        %v955 = vpack.c.bf16 %v951, %v951
        %v956 = vpack.c.bf16 %v952, %v952
        %958 = vrot.lane.b32.xlu0 %v746, 120
        %v959 = vpop.permute.xlu0 %958
        %961 = vrot.lane.b32.xlu0 %v746, 112
        %v962 = vpop.permute.xlu0 %961
        %964 = vrot.lane.b32.xlu0 %v746, 104
        %v965 = vpop.permute.xlu0 %964
        %v967 = vcombine.low %v746, %v962
        %v968 = vcombine.high %v746, %v962
        %v970 = vunpack.c.l.s4 1983009808
        %v971 = vunpack.c.0.s8 %v970
        %v972 = vlaneseq
        %v973 = vshrl.u32 %v972, 7
        %v974 = vsub.s32 %v971, %v973
        %v975 = vrot.slane %v967, %v974
        %v977 = vunpack.c.l.s4 1983009808
        %v978 = vunpack.c.0.s8 %v977
        %v979 = vlaneseq
        %v980 = vshrl.u32 %v979, 7
        %v981 = vsub.s32 %v978, %v980
        %v982 = vrot.slane %v968, %v981
        %v983 = vcombine.low %v959, %v965
        %v984 = vcombine.high %v959, %v965
        %v986 = vunpack.c.l.s4 1983009808
        %v987 = vunpack.c.0.s8 %v986
        %v988 = vlaneseq
        %v989 = vshrl.u32 %v988, 7
        %v990 = vsub.s32 %v987, %v989
        %v991 = vrot.slane %v983, %v990
        %v993 = vunpack.c.l.s4 1983009808
        %v994 = vunpack.c.0.s8 %v993
        %v995 = vlaneseq
        %v996 = vshrl.u32 %v995, 7
        %v997 = vsub.s32 %v994, %v996
        %v998 = vrot.slane %v984, %v997
        %v999 = vcombine.low %v975, %v991
        %v1000 = vcombine.high %v975, %v991
        %v1002 = vunpack.c.l.s4 1934713408
        %v1003 = vunpack.c.0.s8 %v1002
        %v1004 = vlaneseq
        %v1005 = vshrl.u32 %v1004, 7
        %v1006 = vsub.s32 %v1003, %v1005
        %v1007 = vrot.slane %v999, %v1006
        %v1009 = vunpack.c.l.s4 1934713408
        %v1010 = vunpack.c.0.s8 %v1009
        %v1011 = vlaneseq
        %v1012 = vshrl.u32 %v1011, 7
        %v1013 = vsub.s32 %v1010, %v1012
        %v1014 = vrot.slane %v1000, %v1013
        %v1015 = vcombine.low %v982, %v998
        %v1016 = vcombine.high %v982, %v998
        %v1018 = vunpack.c.l.s4 1934713408
        %v1019 = vunpack.c.0.s8 %v1018
        %v1020 = vlaneseq
        %v1021 = vshrl.u32 %v1020, 7
        %v1022 = vsub.s32 %v1019, %v1021
        %v1023 = vrot.slane %v1015, %v1022
        %v1025 = vunpack.c.l.s4 1934713408
        %v1026 = vunpack.c.0.s8 %v1025
        %v1027 = vlaneseq
        %v1028 = vshrl.u32 %v1027, 7
        %v1029 = vsub.s32 %v1026, %v1028
        %v1030 = vrot.slane %v1016, %v1029
        %v1031 = vcombine.high %v1007, 0.0
        %v1032 = vcombine.high %v1014, 0.0
        %v1033 = vcombine.high %v1023, 0.0
        %v1034 = vcombine.high %v1030, 0.0
        %v1035 = vcombine.low %v1007, %v1014
        %v1037 = vunpack.c.l.s4 1983009808
        %v1038 = vunpack.c.0.s8 %v1037
        %v1039 = vlaneseq
        %v1040 = vshrl.u32 %v1039, 7
        %v1041 = vsub.s32 %v1038, %v1040
        %v1042 = vrot.slane %v1035, %v1041
        %v1043 = vcombine.low %v1031, %v1032
        %v1045 = vunpack.c.l.s4 1983009808
        %v1046 = vunpack.c.0.s8 %v1045
        %v1047 = vlaneseq
        %v1048 = vshrl.u32 %v1047, 7
        %v1049 = vsub.s32 %v1046, %v1048
        %v1050 = vrot.slane %v1043, %v1049
        %v1051 = vcombine.low %v1023, %v1030
        %v1053 = vunpack.c.l.s4 1983009808
        %v1054 = vunpack.c.0.s8 %v1053
        %v1055 = vlaneseq
        %v1056 = vshrl.u32 %v1055, 7
        %v1057 = vsub.s32 %v1054, %v1056
        %v1058 = vrot.slane %v1051, %v1057
        %v1059 = vcombine.low %v1033, %v1034
        %v1061 = vunpack.c.l.s4 1983009808
        %v1062 = vunpack.c.0.s8 %v1061
        %v1063 = vlaneseq
        %v1064 = vshrl.u32 %v1063, 7
        %v1065 = vsub.s32 %v1062, %v1064
        %v1066 = vrot.slane %v1059, %v1065
        %v1067 = vcombine.low %v1042, %v1050
        %v1068 = vcombine.high %v1042, %v1050
        %v1070 = vunpack.c.l.s4 1934713408
        %v1071 = vunpack.c.0.s8 %v1070
        %v1072 = vlaneseq
        %v1073 = vshrl.u32 %v1072, 7
        %v1074 = vsub.s32 %v1071, %v1073
        %v1075 = vrot.slane %v1067, %v1074
        %v1077 = vunpack.c.l.s4 1934713408
        %v1078 = vunpack.c.0.s8 %v1077
        %v1079 = vlaneseq
        %v1080 = vshrl.u32 %v1079, 7
        %v1081 = vsub.s32 %v1078, %v1080
        %v1082 = vrot.slane %v1068, %v1081
        %v1083 = vcombine.low %v1058, %v1066
        %v1084 = vcombine.high %v1058, %v1066
        %v1086 = vunpack.c.l.s4 1934713408
        %v1087 = vunpack.c.0.s8 %v1086
        %v1088 = vlaneseq
        %v1089 = vshrl.u32 %v1088, 7
        %v1090 = vsub.s32 %v1087, %v1089
        %v1091 = vrot.slane %v1083, %v1090
        %v1093 = vunpack.c.l.s4 1934713408
        %v1094 = vunpack.c.0.s8 %v1093
        %v1095 = vlaneseq
        %v1096 = vshrl.u32 %v1095, 7
        %v1097 = vsub.s32 %v1094, %v1096
        %v1098 = vrot.slane %v1084, %v1097
        %v1099 = vcombine.low %v1075, %v1091
        %v1100 = vcombine.high %v1075, %v1091
        %v1101 = vcombine.low %v1082, %v1098
        %v1102 = vcombine.high %v1082, %v1098
        %v1103 = vpack.c.bf16 %v1099, %v1099
        %v1104 = vpack.c.bf16 %v1100, %v1100
        %v1105 = vpack.c.bf16 %v1101, %v1101
        %v1106 = vpack.c.bf16 %v1102, %v1102
        %1108 = vrot.lane.b32.xlu0 %v802, 120
        %v1109 = vpop.permute.xlu0 %1108
        %1111 = vrot.lane.b32.xlu0 %v802, 112
        %v1112 = vpop.permute.xlu0 %1111
        %1114 = vrot.lane.b32.xlu0 %v802, 104
        %v1115 = vpop.permute.xlu0 %1114
        %v1117 = vcombine.low %v802, %v1112
        %v1118 = vcombine.high %v802, %v1112
        %v1120 = vunpack.c.l.s4 1983009808
        %v1121 = vunpack.c.0.s8 %v1120
        %v1122 = vlaneseq
        %v1123 = vshrl.u32 %v1122, 7
        %v1124 = vsub.s32 %v1121, %v1123
        %v1125 = vrot.slane %v1117, %v1124
        %v1127 = vunpack.c.l.s4 1983009808
        %v1128 = vunpack.c.0.s8 %v1127
        %v1129 = vlaneseq
        %v1130 = vshrl.u32 %v1129, 7
        %v1131 = vsub.s32 %v1128, %v1130
        %v1132 = vrot.slane %v1118, %v1131
        %v1133 = vcombine.low %v1109, %v1115
        %v1134 = vcombine.high %v1109, %v1115
        %v1136 = vunpack.c.l.s4 1983009808
        %v1137 = vunpack.c.0.s8 %v1136
        %v1138 = vlaneseq
        %v1139 = vshrl.u32 %v1138, 7
        %v1140 = vsub.s32 %v1137, %v1139
        %v1141 = vrot.slane %v1133, %v1140
        %v1143 = vunpack.c.l.s4 1983009808
        %v1144 = vunpack.c.0.s8 %v1143
        %v1145 = vlaneseq
        %v1146 = vshrl.u32 %v1145, 7
        %v1147 = vsub.s32 %v1144, %v1146
        %v1148 = vrot.slane %v1134, %v1147
        %v1149 = vcombine.low %v1125, %v1141
        %v1150 = vcombine.high %v1125, %v1141
        %v1152 = vunpack.c.l.s4 1934713408
        %v1153 = vunpack.c.0.s8 %v1152
        %v1154 = vlaneseq
        %v1155 = vshrl.u32 %v1154, 7
        %v1156 = vsub.s32 %v1153, %v1155
        %v1157 = vrot.slane %v1149, %v1156
        %v1159 = vunpack.c.l.s4 1934713408
        %v1160 = vunpack.c.0.s8 %v1159
        %v1161 = vlaneseq
        %v1162 = vshrl.u32 %v1161, 7
        %v1163 = vsub.s32 %v1160, %v1162
        %v1164 = vrot.slane %v1150, %v1163
        %v1165 = vcombine.low %v1132, %v1148
        %v1166 = vcombine.high %v1132, %v1148
        %v1168 = vunpack.c.l.s4 1934713408
        %v1169 = vunpack.c.0.s8 %v1168
        %v1170 = vlaneseq
        %v1171 = vshrl.u32 %v1170, 7
        %v1172 = vsub.s32 %v1169, %v1171
        %v1173 = vrot.slane %v1165, %v1172
        %v1175 = vunpack.c.l.s4 1934713408
        %v1176 = vunpack.c.0.s8 %v1175
        %v1177 = vlaneseq
        %v1178 = vshrl.u32 %v1177, 7
        %v1179 = vsub.s32 %v1176, %v1178
        %v1180 = vrot.slane %v1166, %v1179
        %v1181 = vcombine.high %v1157, 0.0
        %v1182 = vcombine.high %v1164, 0.0
        %v1183 = vcombine.high %v1173, 0.0
        %v1184 = vcombine.high %v1180, 0.0
        %v1185 = vcombine.low %v1157, %v1164
        %v1187 = vunpack.c.l.s4 1983009808
        %v1188 = vunpack.c.0.s8 %v1187
        %v1189 = vlaneseq
        %v1190 = vshrl.u32 %v1189, 7
        %v1191 = vsub.s32 %v1188, %v1190
        %v1192 = vrot.slane %v1185, %v1191
        %v1193 = vcombine.low %v1181, %v1182
        %v1195 = vunpack.c.l.s4 1983009808
        %v1196 = vunpack.c.0.s8 %v1195
        %v1197 = vlaneseq
        %v1198 = vshrl.u32 %v1197, 7
        %v1199 = vsub.s32 %v1196, %v1198
        %v1200 = vrot.slane %v1193, %v1199
        %v1201 = vcombine.low %v1173, %v1180
        %v1203 = vunpack.c.l.s4 1983009808
        %v1204 = vunpack.c.0.s8 %v1203
        %v1205 = vlaneseq
        %v1206 = vshrl.u32 %v1205, 7
        %v1207 = vsub.s32 %v1204, %v1206
        %v1208 = vrot.slane %v1201, %v1207
        %v1209 = vcombine.low %v1183, %v1184
        %v1211 = vunpack.c.l.s4 1983009808
        %v1212 = vunpack.c.0.s8 %v1211
        %v1213 = vlaneseq
        %v1214 = vshrl.u32 %v1213, 7
        %v1215 = vsub.s32 %v1212, %v1214
        %v1216 = vrot.slane %v1209, %v1215
        %v1217 = vcombine.low %v1192, %v1200
        %v1218 = vcombine.high %v1192, %v1200
        %v1220 = vunpack.c.l.s4 1934713408
        %v1221 = vunpack.c.0.s8 %v1220
        %v1222 = vlaneseq
        %v1223 = vshrl.u32 %v1222, 7
        %v1224 = vsub.s32 %v1221, %v1223
        %v1225 = vrot.slane %v1217, %v1224
        %v1227 = vunpack.c.l.s4 1934713408
        %v1228 = vunpack.c.0.s8 %v1227
        %v1229 = vlaneseq
        %v1230 = vshrl.u32 %v1229, 7
        %v1231 = vsub.s32 %v1228, %v1230
        %v1232 = vrot.slane %v1218, %v1231
        %v1233 = vcombine.low %v1208, %v1216
        %v1234 = vcombine.high %v1208, %v1216
        %v1236 = vunpack.c.l.s4 1934713408
        %v1237 = vunpack.c.0.s8 %v1236
        %v1238 = vlaneseq
        %v1239 = vshrl.u32 %v1238, 7
        %v1240 = vsub.s32 %v1237, %v1239
        %v1241 = vrot.slane %v1233, %v1240
        %v1243 = vunpack.c.l.s4 1934713408
        %v1244 = vunpack.c.0.s8 %v1243
        %v1245 = vlaneseq
        %v1246 = vshrl.u32 %v1245, 7
        %v1247 = vsub.s32 %v1244, %v1246
        %v1248 = vrot.slane %v1234, %v1247
        %v1249 = vcombine.low %v1225, %v1241
        %v1250 = vcombine.high %v1225, %v1241
        %v1251 = vcombine.low %v1232, %v1248
        %v1252 = vcombine.high %v1232, %v1248
        %v1253 = vpack.c.bf16 %v1249, %v1249
        %v1254 = vpack.c.bf16 %v1250, %v1250
        %v1255 = vpack.c.bf16 %v1251, %v1251
        %v1256 = vpack.c.bf16 %v1252, %v1252
        %vm1257 = vcmask 64512
        %v1259 = vsel %vm1257, %v953, 0
        %v1262 = vsel %vm1257, %v1103, 0
        %1264 = vmatprep.subr.bf16.mxu0 0
        %1265 = vmatpush1.bf16.xpose.msra.mxu0 %v1262
        %1266 = vmatprep.subr.bf16.mxu0 0
        %1267 = vmatpush1.bf16.xpose.msra.mxu0 0
        %1268 = vmatprep.subr.bf16.mxu0 0
        %1269 = vmatpush1.bf16.xpose.msra.mxu0 0
        %1270 = vmatprep.subr.bf16.mxu0 0
        %1271 = vmatpush1.bf16.xpose.msra.mxu0 0
        %1272 = vmatprep.subr.bf16.mxu0 0
        %1273 = vmatpush1.bf16.xpose.msra.mxu0 0
        %1274 = vmatprep.subr.bf16.mxu0 0
        %1275 = vmatpush1.bf16.xpose.msra.mxu0 0
        %1276 = vmatprep.subr.bf16.mxu0 0
        %1277 = vmatpush1.bf16.xpose.msra.mxu0 0
        %1278 = vmatprep.subr.bf16.mxu0 0
        %1279 = vmatpush1.bf16.xpose.msra.mxu0 0
        %1280 = vmatprep.subr.bf16.mxu0 0
        %1281 = vmatpush1.bf16.xpose.msra.mxu0 0
        %1282 = vmatprep.subr.bf16.mxu0 0
        %1283 = vmatpush1.bf16.xpose.msra.mxu0 0
        %1284 = vmatprep.subr.bf16.mxu0 0
        %1285 = vmatpush1.bf16.xpose.msra.mxu0 0
        %1286 = vmatprep.subr.bf16.mxu0 0
        %1287 = vmatpush1.bf16.xpose.msra.mxu0 0
        %1288 = vmatprep.subr.bf16.mxu0 0
        %1289 = vmatpush1.bf16.xpose.msra.mxu0 0
        %1290 = vmatprep.subr.bf16.mxu0 0
        %1291 = vmatpush1.bf16.xpose.msra.mxu0 0
        %1292 = vmatprep.subr.bf16.mxu0 0
        %1293 = vmatpush1.bf16.xpose.msra.mxu0 0
        %1294 = vmatprep.subr.bf16.mxu0 0
        %1295 = vmatpush1.bf16.xpose.msra.mxu0 0
        %1296 = vmatprep.mubr.bf16.mxu0 0
        %1297 = vmatmul.mubr.bf16.gmra.mrb[0].mxu0 %v1259
        %v1298 = vpop.f32.mrb[0].mxu0
        %v1299 = vadd.f32 0.0, %v1298
        %v1300 = vpop.f32.mrb[0].mxu0
        %v1301 = vpop.f32.mrb[0].mxu0
        %v1302 = vpop.f32.mrb[0].mxu0
        %1303 = vdwg.mxu0
        %v1305 = vsel %vm1257, %v954, 0
        %v1308 = vsel %vm1257, %v1104, 0
        %1310 = vmatprep.subr.bf16.mxu0 0
        %1311 = vmatpush1.bf16.xpose.msra.mxu0 %v1308
        %1312 = vmatprep.subr.bf16.mxu0 0
        %1313 = vmatpush1.bf16.xpose.msra.mxu0 0
        %1314 = vmatprep.subr.bf16.mxu0 0
        %1315 = vmatpush1.bf16.xpose.msra.mxu0 0
        %1316 = vmatprep.subr.bf16.mxu0 0
        %1317 = vmatpush1.bf16.xpose.msra.mxu0 0
        %1318 = vmatprep.subr.bf16.mxu0 0
        %1319 = vmatpush1.bf16.xpose.msra.mxu0 0
        %1320 = vmatprep.subr.bf16.mxu0 0
        %1321 = vmatpush1.bf16.xpose.msra.mxu0 0
        %1322 = vmatprep.subr.bf16.mxu0 0
        %1323 = vmatpush1.bf16.xpose.msra.mxu0 0
        %1324 = vmatprep.subr.bf16.mxu0 0
        %1325 = vmatpush1.bf16.xpose.msra.mxu0 0
        %1326 = vmatprep.subr.bf16.mxu0 0
        %1327 = vmatpush1.bf16.xpose.msra.mxu0 0
        %1328 = vmatprep.subr.bf16.mxu0 0
        %1329 = vmatpush1.bf16.xpose.msra.mxu0 0
        %1330 = vmatprep.subr.bf16.mxu0 0
        %1331 = vmatpush1.bf16.xpose.msra.mxu0 0
        %1332 = vmatprep.subr.bf16.mxu0 0
        %1333 = vmatpush1.bf16.xpose.msra.mxu0 0
        %1334 = vmatprep.subr.bf16.mxu0 0
        %1335 = vmatpush1.bf16.xpose.msra.mxu0 0
        %1336 = vmatprep.subr.bf16.mxu0 0
        %1337 = vmatpush1.bf16.xpose.msra.mxu0 0
        %1338 = vmatprep.subr.bf16.mxu0 0
        %1339 = vmatpush1.bf16.xpose.msra.mxu0 0
        %1340 = vmatprep.subr.bf16.mxu0 0
        %1341 = vmatpush1.bf16.xpose.msra.mxu0 0
        %1342 = vmatprep.mubr.bf16.mxu0 0
        %1343 = vmatmul.mubr.bf16.gmra.mrb[0].mxu0 %v1305
        %v1344 = vpop.f32.mrb[0].mxu0
        %v1345 = vadd.f32 0.0, %v1344
        %v1346 = vpop.f32.mrb[0].mxu0
        %v1347 = vpop.f32.mrb[0].mxu0
        %v1348 = vpop.f32.mrb[0].mxu0
        %1349 = vdwg.mxu0
        %v1351 = vsel %vm1257, %v955, 0
        %v1354 = vsel %vm1257, %v1105, 0
        %1356 = vmatprep.subr.bf16.mxu0 0
        %1357 = vmatpush1.bf16.xpose.msra.mxu0 %v1354
        %1358 = vmatprep.subr.bf16.mxu0 0
        %1359 = vmatpush1.bf16.xpose.msra.mxu0 0
        %1360 = vmatprep.subr.bf16.mxu0 0
        %1361 = vmatpush1.bf16.xpose.msra.mxu0 0
        %1362 = vmatprep.subr.bf16.mxu0 0
        %1363 = vmatpush1.bf16.xpose.msra.mxu0 0
        %1364 = vmatprep.subr.bf16.mxu0 0
        %1365 = vmatpush1.bf16.xpose.msra.mxu0 0
        %1366 = vmatprep.subr.bf16.mxu0 0
        %1367 = vmatpush1.bf16.xpose.msra.mxu0 0
        %1368 = vmatprep.subr.bf16.mxu0 0
        %1369 = vmatpush1.bf16.xpose.msra.mxu0 0
        %1370 = vmatprep.subr.bf16.mxu0 0
        %1371 = vmatpush1.bf16.xpose.msra.mxu0 0
        %1372 = vmatprep.subr.bf16.mxu0 0
        %1373 = vmatpush1.bf16.xpose.msra.mxu0 0
        %1374 = vmatprep.subr.bf16.mxu0 0
        %1375 = vmatpush1.bf16.xpose.msra.mxu0 0
        %1376 = vmatprep.subr.bf16.mxu0 0
        %1377 = vmatpush1.bf16.xpose.msra.mxu0 0
        %1378 = vmatprep.subr.bf16.mxu0 0
        %1379 = vmatpush1.bf16.xpose.msra.mxu0 0
        %1380 = vmatprep.subr.bf16.mxu0 0
        %1381 = vmatpush1.bf16.xpose.msra.mxu0 0
        %1382 = vmatprep.subr.bf16.mxu0 0
        %1383 = vmatpush1.bf16.xpose.msra.mxu0 0
        %1384 = vmatprep.subr.bf16.mxu0 0
        %1385 = vmatpush1.bf16.xpose.msra.mxu0 0
        %1386 = vmatprep.subr.bf16.mxu0 0
        %1387 = vmatpush1.bf16.xpose.msra.mxu0 0
        %1388 = vmatprep.mubr.bf16.mxu0 0
        %1389 = vmatmul.mubr.bf16.gmra.mrb[0].mxu0 %v1351
        %v1390 = vpop.f32.mrb[0].mxu0
        %v1391 = vadd.f32 0.0, %v1390
        %v1392 = vpop.f32.mrb[0].mxu0
        %v1393 = vpop.f32.mrb[0].mxu0
        %v1394 = vpop.f32.mrb[0].mxu0
        %1395 = vdwg.mxu0
        %v1397 = vsel %vm1257, %v956, 0
        %v1400 = vsel %vm1257, %v1106, 0
        %1402 = vmatprep.subr.bf16.mxu0 0
        %1403 = vmatpush1.bf16.xpose.msra.mxu0 %v1400
        %1404 = vmatprep.subr.bf16.mxu0 0
        %1405 = vmatpush1.bf16.xpose.msra.mxu0 0
        %1406 = vmatprep.subr.bf16.mxu0 0
        %1407 = vmatpush1.bf16.xpose.msra.mxu0 0
        %1408 = vmatprep.subr.bf16.mxu0 0
        %1409 = vmatpush1.bf16.xpose.msra.mxu0 0
        %1410 = vmatprep.subr.bf16.mxu0 0
        %1411 = vmatpush1.bf16.xpose.msra.mxu0 0
        %1412 = vmatprep.subr.bf16.mxu0 0
        %1413 = vmatpush1.bf16.xpose.msra.mxu0 0
        %1414 = vmatprep.subr.bf16.mxu0 0
        %1415 = vmatpush1.bf16.xpose.msra.mxu0 0
        %1416 = vmatprep.subr.bf16.mxu0 0
        %1417 = vmatpush1.bf16.xpose.msra.mxu0 0
        %1418 = vmatprep.subr.bf16.mxu0 0
        %1419 = vmatpush1.bf16.xpose.msra.mxu0 0
        %1420 = vmatprep.subr.bf16.mxu0 0
        %1421 = vmatpush1.bf16.xpose.msra.mxu0 0
        %1422 = vmatprep.subr.bf16.mxu0 0
        %1423 = vmatpush1.bf16.xpose.msra.mxu0 0
        %1424 = vmatprep.subr.bf16.mxu0 0
        %1425 = vmatpush1.bf16.xpose.msra.mxu0 0
        %1426 = vmatprep.subr.bf16.mxu0 0
        %1427 = vmatpush1.bf16.xpose.msra.mxu0 0
        %1428 = vmatprep.subr.bf16.mxu0 0
        %1429 = vmatpush1.bf16.xpose.msra.mxu0 0
        %1430 = vmatprep.subr.bf16.mxu0 0
        %1431 = vmatpush1.bf16.xpose.msra.mxu0 0
        %1432 = vmatprep.subr.bf16.mxu0 0
        %1433 = vmatpush1.bf16.xpose.msra.mxu0 0
        %1434 = vmatprep.mubr.bf16.mxu0 0
        %1435 = vmatmul.mubr.bf16.gmra.mrb[0].mxu0 %v1397
        %v1436 = vpop.f32.mrb[0].mxu0
        %v1437 = vadd.f32 0.0, %v1436
        %v1438 = vpop.f32.mrb[0].mxu0
        %v1439 = vpop.f32.mrb[0].mxu0
        %v1440 = vpop.f32.mrb[0].mxu0
        %1441 = vdwg.mxu0
        %v1442 = vsel %vm1257, %v1299, -inf
        %1443 = vmax.xlane.f32.xlu0 %v1442
        %v1444 = vpop.xlane.xlu0 %1443
        %v1445 = vsel %vm1257, %v1345, -inf
        %1446 = vmax.xlane.f32.xlu0 %v1445
        %v1447 = vpop.xlane.xlu0 %1446
        %v1448 = vsel %vm1257, %v1391, -inf
        %1449 = vmax.xlane.f32.xlu0 %v1448
        %v1450 = vpop.xlane.xlu0 %1449
        %v1451 = vsel %vm1257, %v1437, -inf
        %1452 = vmax.xlane.f32.xlu0 %v1451
        %v1453 = vpop.xlane.xlu0 %1452
        %v1454 = vsub.f32 %v1299, %v1444
        %v1455 = vsub.f32 %v1345, %v1447
        %v1456 = vsub.f32 %v1391, %v1450
        %v1457 = vsub.f32 %v1437, %v1453
        %v1458 = vmul.f32 %v1454, 1.442695
        %v1459 = vpow.pop %v1458
        %v1460 = vmul.f32 %v1455, 1.442695
        %v1461 = vpow.pop %v1460
        %v1462 = vmul.f32 %v1456, 1.442695
        %v1463 = vpow.pop %v1462
        %v1464 = vmul.f32 %v1457, 1.442695
        %v1465 = vpow.pop %v1464
        %v1466 = vsel %vm1257, %v1459, 0.0
        %1467 = vadd.xlane.f32.xlu0 %v1466
        %v1468 = vpop.xlane.xlu0 %1467
        %v1469 = vsel %vm1257, %v1461, 0.0
        %1470 = vadd.xlane.f32.xlu0 %v1469
        %v1471 = vpop.xlane.xlu0 %1470
        %v1472 = vsel %vm1257, %v1463, 0.0
        %1473 = vadd.xlane.f32.xlu0 %v1472
        %v1474 = vpop.xlane.xlu0 %1473
        %v1475 = vsel %vm1257, %v1465, 0.0
        %1476 = vadd.xlane.f32.xlu0 %v1475
        %v1477 = vpop.xlane.xlu0 %1476
        %v1478 = vpack.c.bf16 %v1459, %v1459
        %v1479 = vpack.c.bf16 %v1461, %v1461
        %v1480 = vpack.c.bf16 %v1463, %v1463
        %v1481 = vpack.c.bf16 %v1465, %v1465
        %v1483 = vsel %vm1257, %v1478, 0
        %vm1485 = vcmask 1043456
        %v1487 = vsel %vm1485, %v1253, 0
        %1489 = vmatprep.subr.bf16.mxu0 0
        %1490 = vmatpush1.bf16.msra.mxu0 %v1487
        %1491 = vmatprep.subr.bf16.mxu0 0
        %1492 = vmatpush1.bf16.msra.mxu0 0
        %1493 = vmatprep.subr.bf16.mxu0 0
        %1494 = vmatpush1.bf16.msra.mxu0 0
        %1495 = vmatprep.subr.bf16.mxu0 0
        %1496 = vmatpush1.bf16.msra.mxu0 0
        %1497 = vmatprep.subr.bf16.mxu0 0
        %1498 = vmatpush1.bf16.msra.mxu0 0
        %1499 = vmatprep.subr.bf16.mxu0 0
        %1500 = vmatpush1.bf16.msra.mxu0 0
        %1501 = vmatprep.subr.bf16.mxu0 0
        %1502 = vmatpush1.bf16.msra.mxu0 0
        %1503 = vmatprep.subr.bf16.mxu0 0
        %1504 = vmatpush1.bf16.msra.mxu0 0
        %1505 = vmatprep.subr.bf16.mxu0 0
        %1506 = vmatpush1.bf16.msra.mxu0 0
        %1507 = vmatprep.subr.bf16.mxu0 0
        %1508 = vmatpush1.bf16.msra.mxu0 0
        %1509 = vmatprep.subr.bf16.mxu0 0
        %1510 = vmatpush1.bf16.msra.mxu0 0
        %1511 = vmatprep.subr.bf16.mxu0 0
        %1512 = vmatpush1.bf16.msra.mxu0 0
        %1513 = vmatprep.subr.bf16.mxu0 0
        %1514 = vmatpush1.bf16.msra.mxu0 0
        %1515 = vmatprep.subr.bf16.mxu0 0
        %1516 = vmatpush1.bf16.msra.mxu0 0
        %1517 = vmatprep.subr.bf16.mxu0 0
        %1518 = vmatpush1.bf16.msra.mxu0 0
        %1519 = vmatprep.subr.bf16.mxu0 0
        %1520 = vmatpush1.bf16.msra.mxu0 0
        %1521 = vmatprep.mubr.bf16.mxu0 0
        %1522 = vmatmul.mubr.bf16.gmra.mrb[0].mxu0 %v1483
        %v1523 = vpop.f32.mrb[0].mxu0
        %v1524 = vadd.f32 0.0, %v1523
        %v1525 = vpop.f32.mrb[0].mxu0
        %v1526 = vpop.f32.mrb[0].mxu0
        %v1527 = vpop.f32.mrb[0].mxu0
        %1528 = vdwg.mxu0
        %v1530 = vsel %vm1257, %v1479, 0
        %v1533 = vsel %vm1485, %v1254, 0
        %1535 = vmatprep.subr.bf16.mxu0 0
        %1536 = vmatpush1.bf16.msra.mxu0 %v1533
        %1537 = vmatprep.subr.bf16.mxu0 0
        %1538 = vmatpush1.bf16.msra.mxu0 0
        %1539 = vmatprep.subr.bf16.mxu0 0
        %1540 = vmatpush1.bf16.msra.mxu0 0
        %1541 = vmatprep.subr.bf16.mxu0 0
        %1542 = vmatpush1.bf16.msra.mxu0 0
        %1543 = vmatprep.subr.bf16.mxu0 0
        %1544 = vmatpush1.bf16.msra.mxu0 0
        %1545 = vmatprep.subr.bf16.mxu0 0
        %1546 = vmatpush1.bf16.msra.mxu0 0
        %1547 = vmatprep.subr.bf16.mxu0 0
        %1548 = vmatpush1.bf16.msra.mxu0 0
        %1549 = vmatprep.subr.bf16.mxu0 0
        %1550 = vmatpush1.bf16.msra.mxu0 0
        %1551 = vmatprep.subr.bf16.mxu0 0
        %1552 = vmatpush1.bf16.msra.mxu0 0
        %1553 = vmatprep.subr.bf16.mxu0 0
        %1554 = vmatpush1.bf16.msra.mxu0 0
        %1555 = vmatprep.subr.bf16.mxu0 0
        %1556 = vmatpush1.bf16.msra.mxu0 0
        %1557 = vmatprep.subr.bf16.mxu0 0
        %1558 = vmatpush1.bf16.msra.mxu0 0
        %1559 = vmatprep.subr.bf16.mxu0 0
        %1560 = vmatpush1.bf16.msra.mxu0 0
        %1561 = vmatprep.subr.bf16.mxu0 0
        %1562 = vmatpush1.bf16.msra.mxu0 0
        %1563 = vmatprep.subr.bf16.mxu0 0
        %1564 = vmatpush1.bf16.msra.mxu0 0
        %1565 = vmatprep.subr.bf16.mxu0 0
        %1566 = vmatpush1.bf16.msra.mxu0 0
        %1567 = vmatprep.mubr.bf16.mxu0 0
        %1568 = vmatmul.mubr.bf16.gmra.mrb[0].mxu0 %v1530
        %v1569 = vpop.f32.mrb[0].mxu0
        %v1570 = vadd.f32 0.0, %v1569
        %v1571 = vpop.f32.mrb[0].mxu0
        %v1572 = vpop.f32.mrb[0].mxu0
        %v1573 = vpop.f32.mrb[0].mxu0
        %1574 = vdwg.mxu0
        %v1576 = vsel %vm1257, %v1480, 0
        %v1579 = vsel %vm1485, %v1255, 0
        %1581 = vmatprep.subr.bf16.mxu0 0
        %1582 = vmatpush1.bf16.msra.mxu0 %v1579
        %1583 = vmatprep.subr.bf16.mxu0 0
        %1584 = vmatpush1.bf16.msra.mxu0 0
        %1585 = vmatprep.subr.bf16.mxu0 0
        %1586 = vmatpush1.bf16.msra.mxu0 0
        %1587 = vmatprep.subr.bf16.mxu0 0
        %1588 = vmatpush1.bf16.msra.mxu0 0
        %1589 = vmatprep.subr.bf16.mxu0 0
        %1590 = vmatpush1.bf16.msra.mxu0 0
        %1591 = vmatprep.subr.bf16.mxu0 0
        %1592 = vmatpush1.bf16.msra.mxu0 0
        %1593 = vmatprep.subr.bf16.mxu0 0
        %1594 = vmatpush1.bf16.msra.mxu0 0
        %1595 = vmatprep.subr.bf16.mxu0 0
        %1596 = vmatpush1.bf16.msra.mxu0 0
        %1597 = vmatprep.subr.bf16.mxu0 0
        %1598 = vmatpush1.bf16.msra.mxu0 0
        %1599 = vmatprep.subr.bf16.mxu0 0
        %1600 = vmatpush1.bf16.msra.mxu0 0
        %1601 = vmatprep.subr.bf16.mxu0 0
        %1602 = vmatpush1.bf16.msra.mxu0 0
        %1603 = vmatprep.subr.bf16.mxu0 0
        %1604 = vmatpush1.bf16.msra.mxu0 0
        %1605 = vmatprep.subr.bf16.mxu0 0
        %1606 = vmatpush1.bf16.msra.mxu0 0
        %1607 = vmatprep.subr.bf16.mxu0 0
        %1608 = vmatpush1.bf16.msra.mxu0 0
        %1609 = vmatprep.subr.bf16.mxu0 0
        %1610 = vmatpush1.bf16.msra.mxu0 0
        %1611 = vmatprep.subr.bf16.mxu0 0
        %1612 = vmatpush1.bf16.msra.mxu0 0
        %1613 = vmatprep.mubr.bf16.mxu0 0
        %1614 = vmatmul.mubr.bf16.gmra.mrb[0].mxu0 %v1576
        %v1615 = vpop.f32.mrb[0].mxu0
        %v1616 = vadd.f32 0.0, %v1615
        %v1617 = vpop.f32.mrb[0].mxu0
        %v1618 = vpop.f32.mrb[0].mxu0
        %v1619 = vpop.f32.mrb[0].mxu0
        %1620 = vdwg.mxu0
        %v1622 = vsel %vm1257, %v1481, 0
        %v1625 = vsel %vm1485, %v1256, 0
        %1627 = vmatprep.subr.bf16.mxu0 0
        %1628 = vmatpush1.bf16.msra.mxu0 %v1625
        %1629 = vmatprep.subr.bf16.mxu0 0
        %1630 = vmatpush1.bf16.msra.mxu0 0
        %1631 = vmatprep.subr.bf16.mxu0 0
        %1632 = vmatpush1.bf16.msra.mxu0 0
        %1633 = vmatprep.subr.bf16.mxu0 0
        %1634 = vmatpush1.bf16.msra.mxu0 0
        %1635 = vmatprep.subr.bf16.mxu0 0
        %1636 = vmatpush1.bf16.msra.mxu0 0
        %1637 = vmatprep.subr.bf16.mxu0 0
        %1638 = vmatpush1.bf16.msra.mxu0 0
        %1639 = vmatprep.subr.bf16.mxu0 0
        %1640 = vmatpush1.bf16.msra.mxu0 0
        %1641 = vmatprep.subr.bf16.mxu0 0
        %1642 = vmatpush1.bf16.msra.mxu0 0
        %1643 = vmatprep.subr.bf16.mxu0 0
        %1644 = vmatpush1.bf16.msra.mxu0 0
        %1645 = vmatprep.subr.bf16.mxu0 0
        %1646 = vmatpush1.bf16.msra.mxu0 0
        %1647 = vmatprep.subr.bf16.mxu0 0
        %1648 = vmatpush1.bf16.msra.mxu0 0
        %1649 = vmatprep.subr.bf16.mxu0 0
        %1650 = vmatpush1.bf16.msra.mxu0 0
        %1651 = vmatprep.subr.bf16.mxu0 0
        %1652 = vmatpush1.bf16.msra.mxu0 0
        %1653 = vmatprep.subr.bf16.mxu0 0
        %1654 = vmatpush1.bf16.msra.mxu0 0
        %1655 = vmatprep.subr.bf16.mxu0 0
        %1656 = vmatpush1.bf16.msra.mxu0 0
        %1657 = vmatprep.subr.bf16.mxu0 0
        %1658 = vmatpush1.bf16.msra.mxu0 0
        %1659 = vmatprep.mubr.bf16.mxu0 0
        %1660 = vmatmul.mubr.bf16.gmra.mrb[0].mxu0 %v1622
        %v1661 = vpop.f32.mrb[0].mxu0
        %v1662 = vadd.f32 0.0, %v1661
        %v1663 = vpop.f32.mrb[0].mxu0
        %v1664 = vpop.f32.mrb[0].mxu0
        %v1665 = vpop.f32.mrb[0].mxu0
        %1666 = vdwg.mxu0
        %v1667 = vrcp.pop %v1468
        %v1668 = vrcp.pop %v1471
        %v1669 = vrcp.pop %v1474
        %v1670 = vrcp.pop %v1477
        %v1671 = vmul.f32 %v1524, %v1667
        %v1672 = vmul.f32 %v1570, %v1668
        %v1673 = vmul.f32 %v1616, %v1669
        %v1674 = vmul.f32 %v1662, %v1670
        %v1675 = vcombine.low %v1671, %v1673
        %v1676 = vcombine.high %v1671, %v1673
        %v1678 = vunpack.c.l.s4 1983009808
        %v1679 = vunpack.c.0.s8 %v1678
        %v1680 = vlaneseq
        %v1681 = vshrl.u32 %v1680, 7
        %v1682 = vsub.s32 %v1679, %v1681
        %v1683 = vrot.slane %v1675, %v1682
        %v1685 = vunpack.c.l.s4 1983009808
        %v1686 = vunpack.c.0.s8 %v1685
        %v1687 = vlaneseq
        %v1688 = vshrl.u32 %v1687, 7
        %v1689 = vsub.s32 %v1686, %v1688
        %v1690 = vrot.slane %v1676, %v1689
        %v1691 = vcombine.low %v1672, %v1674
        %v1692 = vcombine.high %v1672, %v1674
        %v1694 = vunpack.c.l.s4 1983009808
        %v1695 = vunpack.c.0.s8 %v1694
        %v1696 = vlaneseq
        %v1697 = vshrl.u32 %v1696, 7
        %v1698 = vsub.s32 %v1695, %v1697
        %v1699 = vrot.slane %v1691, %v1698
        %v1701 = vunpack.c.l.s4 1983009808
        %v1702 = vunpack.c.0.s8 %v1701
        %v1703 = vlaneseq
        %v1704 = vshrl.u32 %v1703, 7
        %v1705 = vsub.s32 %v1702, %v1704
        %v1706 = vrot.slane %v1692, %v1705
        %v1707 = vcombine.low %v1683, %v1699
        %v1708 = vcombine.high %v1683, %v1699
        %v1710 = vunpack.c.l.s4 1934713408
        %v1711 = vunpack.c.0.s8 %v1710
        %v1712 = vlaneseq
        %v1713 = vshrl.u32 %v1712, 7
        %v1714 = vsub.s32 %v1711, %v1713
        %v1715 = vrot.slane %v1707, %v1714
        %v1717 = vunpack.c.l.s4 1934713408
        %v1718 = vunpack.c.0.s8 %v1717
        %v1719 = vlaneseq
        %v1720 = vshrl.u32 %v1719, 7
        %v1721 = vsub.s32 %v1718, %v1720
        %v1722 = vrot.slane %v1708, %v1721
        %v1723 = vcombine.low %v1690, %v1706
        %v1724 = vcombine.high %v1690, %v1706
        %v1726 = vunpack.c.l.s4 1934713408
        %v1727 = vunpack.c.0.s8 %v1726
        %v1728 = vlaneseq
        %v1729 = vshrl.u32 %v1728, 7
        %v1730 = vsub.s32 %v1727, %v1729
        %v1731 = vrot.slane %v1723, %v1730
        %v1733 = vunpack.c.l.s4 1934713408
        %v1734 = vunpack.c.0.s8 %v1733
        %v1735 = vlaneseq
        %v1736 = vshrl.u32 %v1735, 7
        %v1737 = vsub.s32 %v1734, %v1736
        %v1738 = vrot.slane %v1724, %v1737
        %v1739 = vcombine.high %v1715, 0.0
        %v1740 = vcombine.high %v1722, 0.0
        %v1741 = vcombine.high %v1731, 0.0
        %v1742 = vcombine.high %v1738, 0.0
        %v1743 = vcombine.low %v1715, %v1722
        %v1745 = vunpack.c.l.s4 1983009808
        %v1746 = vunpack.c.0.s8 %v1745
        %v1747 = vlaneseq
        %v1748 = vshrl.u32 %v1747, 7
        %v1749 = vsub.s32 %v1746, %v1748
        %v1750 = vrot.slane %v1743, %v1749
        %v1751 = vcombine.low %v1739, %v1740
        %v1753 = vunpack.c.l.s4 1983009808
        %v1754 = vunpack.c.0.s8 %v1753
        %v1755 = vlaneseq
        %v1756 = vshrl.u32 %v1755, 7
        %v1757 = vsub.s32 %v1754, %v1756
        %v1758 = vrot.slane %v1751, %v1757
        %v1759 = vcombine.low %v1731, %v1738
        %v1761 = vunpack.c.l.s4 1983009808
        %v1762 = vunpack.c.0.s8 %v1761
        %v1763 = vlaneseq
        %v1764 = vshrl.u32 %v1763, 7
        %v1765 = vsub.s32 %v1762, %v1764
        %v1766 = vrot.slane %v1759, %v1765
        %v1767 = vcombine.low %v1741, %v1742
        %v1769 = vunpack.c.l.s4 1983009808
        %v1770 = vunpack.c.0.s8 %v1769
        %v1771 = vlaneseq
        %v1772 = vshrl.u32 %v1771, 7
        %v1773 = vsub.s32 %v1770, %v1772
        %v1774 = vrot.slane %v1767, %v1773
        %v1775 = vcombine.low %v1750, %v1758
        %v1776 = vcombine.high %v1750, %v1758
        %v1778 = vunpack.c.l.s4 1934713408
        %v1779 = vunpack.c.0.s8 %v1778
        %v1780 = vlaneseq
        %v1781 = vshrl.u32 %v1780, 7
        %v1782 = vsub.s32 %v1779, %v1781
        %v1783 = vrot.slane %v1775, %v1782
        %v1785 = vunpack.c.l.s4 1934713408
        %v1786 = vunpack.c.0.s8 %v1785
        %v1787 = vlaneseq
        %v1788 = vshrl.u32 %v1787, 7
        %v1789 = vsub.s32 %v1786, %v1788
        %v1790 = vrot.slane %v1776, %v1789
        %v1791 = vcombine.low %v1766, %v1774
        %v1792 = vcombine.high %v1766, %v1774
        %v1794 = vunpack.c.l.s4 1934713408
        %v1795 = vunpack.c.0.s8 %v1794
        %v1796 = vlaneseq
        %v1797 = vshrl.u32 %v1796, 7
        %v1798 = vsub.s32 %v1795, %v1797
        %v1799 = vrot.slane %v1791, %v1798
        %v1801 = vunpack.c.l.s4 1934713408
        %v1802 = vunpack.c.0.s8 %v1801
        %v1803 = vlaneseq
        %v1804 = vshrl.u32 %v1803, 7
        %v1805 = vsub.s32 %v1802, %v1804
        %v1806 = vrot.slane %v1792, %v1805
        %v1807 = vcombine.low %v1783, %v1799
        %v1808 = vcombine.high %v1783, %v1799
        %v1809 = vcombine.low %v1790, %v1806
        %v1810 = vcombine.high %v1790, %v1806
        %1812 = vrot.lane.b32.xlu0 %v1808, 8
        %v1813 = vpop.permute.xlu0 %1812
        %1816 = vrot.lane.b32.xlu0 %v1809, 16
        %v1817 = vpop.permute.xlu0 %1816
        %1820 = vrot.lane.b32.xlu0 %v1810, 24
        %v1821 = vpop.permute.xlu0 %1820
        %v1823 = vsel %vm1257, %v1807, %v1813
        %vm1824 = vcmask 130048
        %v1825 = vsel %vm1824, %v1823, %v1817
        %vm1826 = vcmask 195584
        %v1827 = vsel %vm1826, %v1825, %v1821
        %v1828 = vpack.c.bf16 %v1827, %v1827
        %v1829 = vld [vmem:[#allocation10] sm:$0xf]
        %v1830 = vld [vmem:[#allocation10 + $0x4] sm:$0xf]
        %v1831 = vld [vmem:[#allocation10 + $0x8] sm:$0xf]
        %v1832 = vld [vmem:[#allocation10 + $0xc] sm:$0xf]
        %v1837 = vunpack.c.l.b16 %v1829
        %v1838 = vunpack.c.l.b16 %v1830
        %v1839 = vunpack.c.l.b16 %v1831
        %v1840 = vunpack.c.l.b16 %v1832
        %v1841 = vpack.c.b16 %v1838, %v1837
        %v1842 = vpack.c.b16 %v1840, %v1839
        %v1846 = vsel %vm651, %v1828, 0
        %1848 = vmatprep.subr.bf16.mxu0 0
        %1849 = vmatpush1.bf16.msra.mxu0 %v1841
        %1850 = vmatprep.subr.bf16.mxu0 0
        %1851 = vmatpush1.bf16.msra.mxu0 %v1842
        %1852 = vmatprep.subr.bf16.mxu0 0
        %1853 = vmatpush1.bf16.msra.mxu0 0
        %1854 = vmatprep.subr.bf16.mxu0 0
        %1855 = vmatpush1.bf16.msra.mxu0 0
        %1856 = vmatprep.subr.bf16.mxu0 0
        %1857 = vmatpush1.bf16.msra.mxu0 0
        %1858 = vmatprep.subr.bf16.mxu0 0
        %1859 = vmatpush1.bf16.msra.mxu0 0
        %1860 = vmatprep.subr.bf16.mxu0 0
        %1861 = vmatpush1.bf16.msra.mxu0 0
        %1862 = vmatprep.subr.bf16.mxu0 0
        %1863 = vmatpush1.bf16.msra.mxu0 0
        %1864 = vmatprep.subr.bf16.mxu0 0
        %1865 = vmatpush1.bf16.msra.mxu0 0
        %1866 = vmatprep.subr.bf16.mxu0 0
        %1867 = vmatpush1.bf16.msra.mxu0 0
        %1868 = vmatprep.subr.bf16.mxu0 0
        %1869 = vmatpush1.bf16.msra.mxu0 0
        %1870 = vmatprep.subr.bf16.mxu0 0
        %1871 = vmatpush1.bf16.msra.mxu0 0
        %1872 = vmatprep.subr.bf16.mxu0 0
        %1873 = vmatpush1.bf16.msra.mxu0 0
        %1874 = vmatprep.subr.bf16.mxu0 0
        %1875 = vmatpush1.bf16.msra.mxu0 0
        %1876 = vmatprep.subr.bf16.mxu0 0
        %1877 = vmatpush1.bf16.msra.mxu0 0
        %1878 = vmatprep.subr.bf16.mxu0 0
        %1879 = vmatpush1.bf16.msra.mxu0 0
        %1880 = vmatprep.mubr.bf16.mxu0 0
        %1881 = vmatmul.mubr.bf16.gmra.mrb[0].mxu0 %v1846
        %v1882 = vpop.f32.mrb[0].mxu0
        %v1883 = vadd.f32 0.0, %v1882
        %v1884 = vpop.f32.mrb[0].mxu0
        %v1885 = vpop.f32.mrb[0].mxu0
        %v1886 = vpop.f32.mrb[0].mxu0
        %1887 = vdwg.mxu0
        %v1888 = vld [vmem:[#allocation11] sm:$0x1]
        %v1889 = vld [vmem:[#allocation13] sm:$0x1]
        %v1890 = vsel %vm651, %v1883, 0.0
        %1891 = vadd.xlane.f32.xlu0 %v1890
        %v1892 = vpop.xlane.xlu0 %1891
        %v1893 = vrcp.pop 32.0
        %v1894 = vmul.f32 %v1892, %v1893
        %v1895 = vsub.f32 %v1883, %v1894
        %v1896 = vmul.f32 %v1895, %v1895
        %v1897 = vsel %vm651, %v1896, 0.0
        %1898 = vadd.xlane.f32.xlu0 %v1897
        %v1899 = vpop.xlane.xlu0 %1898
        %v1900 = vmul.f32 %v1899, %v1893
        %v1901 = vadd.f32 %v1900, 1e-05
        %v1902 = vrsqrt.pop %v1901
        %v1903 = vmul.f32 %v1895, %v1902
        %v1905 = vlaneseq
        %v1906 = vshrl.u32 %v1905, 7
        %v1907 = vsub.s32 0, %v1906
        %v1908 = vrot.slane %v1888, %v1907
        %v1910 = vmul.f32 %v1903, %v1908
        %v1912 = vlaneseq
        %v1913 = vshrl.u32 %v1912, 7
        %v1914 = vsub.s32 0, %v1913
        %v1915 = vrot.slane %v1889, %v1914
        %v1917 = vadd.f32 %v1910, %v1915
        %v1918 = vadd.f32 %v633, %v1917
        %v1919 = vpack.c.bf16 %v1918, %v1918
        %v1920 = vld [vmem:[#allocation14] sm:$0xf]
        %v1921 = vld [vmem:[#allocation14 + $0x4] sm:$0xf]
        %v1922 = vld [vmem:[#allocation14 + $0x8] sm:$0xf]
        %v1923 = vld [vmem:[#allocation14 + $0xc] sm:$0xf]
        %v1924 = vld [vmem:[#allocation16] sm:$0x1]
        %v1926 = vlaneseq
        %v1927 = vshrl.u32 %v1926, 7
        %v1928 = vsub.s32 0, %v1927
        %v1929 = vrot.slane %v1924, %v1928
        %v1935 = vunpack.c.l.b16 %v1920
        %v1936 = vunpack.c.l.b16 %v1921
        %v1937 = vunpack.c.l.b16 %v1922
        %v1938 = vunpack.c.l.b16 %v1923
        %v1939 = vpack.c.b16 %v1936, %v1935
        %v1940 = vpack.c.b16 %v1938, %v1937
        %v1944 = vsel %vm651, %v1919, 0
        %1946 = vmatprep.subr.bf16.mxu0 0
        %1947 = vmatpush1.bf16.msra.mxu0 %v1939
        %1948 = vmatprep.subr.bf16.mxu0 0
        %1949 = vmatpush1.bf16.msra.mxu0 %v1940
        %1950 = vmatprep.subr.bf16.mxu0 0
        %1951 = vmatpush1.bf16.msra.mxu0 0
        %1952 = vmatprep.subr.bf16.mxu0 0
        %1953 = vmatpush1.bf16.msra.mxu0 0
        %1954 = vmatprep.subr.bf16.mxu0 0
        %1955 = vmatpush1.bf16.msra.mxu0 0
        %1956 = vmatprep.subr.bf16.mxu0 0
        %1957 = vmatpush1.bf16.msra.mxu0 0
        %1958 = vmatprep.subr.bf16.mxu0 0
        %1959 = vmatpush1.bf16.msra.mxu0 0
        %1960 = vmatprep.subr.bf16.mxu0 0
        %1961 = vmatpush1.bf16.msra.mxu0 0
        %1962 = vmatprep.subr.bf16.mxu0 0
        %1963 = vmatpush1.bf16.msra.mxu0 0
        %1964 = vmatprep.subr.bf16.mxu0 0
        %1965 = vmatpush1.bf16.msra.mxu0 0
        %1966 = vmatprep.subr.bf16.mxu0 0
        %1967 = vmatpush1.bf16.msra.mxu0 0
        %1968 = vmatprep.subr.bf16.mxu0 0
        %1969 = vmatpush1.bf16.msra.mxu0 0
        %1970 = vmatprep.subr.bf16.mxu0 0
        %1971 = vmatpush1.bf16.msra.mxu0 0
        %1972 = vmatprep.subr.bf16.mxu0 0
        %1973 = vmatpush1.bf16.msra.mxu0 0
        %1974 = vmatprep.subr.bf16.mxu0 0
        %1975 = vmatpush1.bf16.msra.mxu0 0
        %1976 = vmatprep.subr.bf16.mxu0 0
        %1977 = vmatpush1.bf16.msra.mxu0 0
        %1978 = vmatprep.mubr.bf16.mxu0 0
        %1979 = vmatmul.mubr.bf16.gmra.mrb[0].mxu0 %v1944
        %v1980 = vpop.f32.mrb[0].mxu0
        %v1981 = vadd.f32 %v1929, %v1980
        %v1982 = vpop.f32.mrb[0].mxu0
        %v1983 = vpop.f32.mrb[0].mxu0
        %v1984 = vpop.f32.mrb[0].mxu0
        %1985 = vdwg.mxu0
        %v1986 = vmax.f32 %v1981, 0.0
        %v1987 = vpack.c.bf16 %v1986, %v1986
        %v1988 = vld [vmem:[#allocation17] sm:$0xf]
        %v1989 = vld [vmem:[#allocation17 + $0x4] sm:$0xf]
        %v1990 = vld [vmem:[#allocation17 + $0x8] sm:$0xf]
        %v1991 = vld [vmem:[#allocation17 + $0xc] sm:$0xf]
        %v1992 = vld [vmem:[#allocation19] sm:$0x1]
        %v1994 = vlaneseq
        %v1995 = vshrl.u32 %v1994, 7
        %v1996 = vsub.s32 0, %v1995
        %v1997 = vrot.slane %v1992, %v1996
        %v2003 = vunpack.c.l.b16 %v1988
        %v2004 = vunpack.c.l.b16 %v1989
        %v2005 = vunpack.c.l.b16 %v1990
        %v2006 = vunpack.c.l.b16 %v1991
        %v2007 = vpack.c.b16 %v2004, %v2003
        %v2008 = vpack.c.b16 %v2006, %v2005
        %v2012 = vsel %vm651, %v1987, 0
        %2014 = vmatprep.subr.bf16.mxu0 0
        %2015 = vmatpush1.bf16.msra.mxu0 %v2007
        %2016 = vmatprep.subr.bf16.mxu0 0
        %2017 = vmatpush1.bf16.msra.mxu0 %v2008
        %2018 = vmatprep.subr.bf16.mxu0 0
        %2019 = vmatpush1.bf16.msra.mxu0 0
        %2020 = vmatprep.subr.bf16.mxu0 0
        %2021 = vmatpush1.bf16.msra.mxu0 0
        %2022 = vmatprep.subr.bf16.mxu0 0
        %2023 = vmatpush1.bf16.msra.mxu0 0
        %2024 = vmatprep.subr.bf16.mxu0 0
        %2025 = vmatpush1.bf16.msra.mxu0 0
        %2026 = vmatprep.subr.bf16.mxu0 0
        %2027 = vmatpush1.bf16.msra.mxu0 0
        %2028 = vmatprep.subr.bf16.mxu0 0
        %2029 = vmatpush1.bf16.msra.mxu0 0
        %2030 = vmatprep.subr.bf16.mxu0 0
        %2031 = vmatpush1.bf16.msra.mxu0 0
        %2032 = vmatprep.subr.bf16.mxu0 0
        %2033 = vmatpush1.bf16.msra.mxu0 0
        %2034 = vmatprep.subr.bf16.mxu0 0
        %2035 = vmatpush1.bf16.msra.mxu0 0
        %2036 = vmatprep.subr.bf16.mxu0 0
        %2037 = vmatpush1.bf16.msra.mxu0 0
        %2038 = vmatprep.subr.bf16.mxu0 0
        %2039 = vmatpush1.bf16.msra.mxu0 0
        %2040 = vmatprep.subr.bf16.mxu0 0
        %2041 = vmatpush1.bf16.msra.mxu0 0
        %2042 = vmatprep.subr.bf16.mxu0 0
        %2043 = vmatpush1.bf16.msra.mxu0 0
        %2044 = vmatprep.subr.bf16.mxu0 0
        %2045 = vmatpush1.bf16.msra.mxu0 0
        %2046 = vmatprep.mubr.bf16.mxu0 0
        %2047 = vmatmul.mubr.bf16.gmra.mrb[0].mxu0 %v2012
        %v2048 = vpop.f32.mrb[0].mxu0
        %v2049 = vadd.f32 %v1997, %v2048
        %v2050 = vpop.f32.mrb[0].mxu0
        %v2051 = vpop.f32.mrb[0].mxu0
        %v2052 = vpop.f32.mrb[0].mxu0
        %2053 = vdwg.mxu0
        %v2054 = vld [vmem:[#allocation20] sm:$0x1]
        %v2055 = vld [vmem:[#allocation22] sm:$0x1]
        %v2056 = vsel %vm651, %v2049, 0.0
        %2057 = vadd.xlane.f32.xlu0 %v2056
        %v2058 = vpop.xlane.xlu0 %2057
        %v2059 = vmul.f32 %v2058, %v1893
        %v2060 = vsub.f32 %v2049, %v2059
        %v2061 = vmul.f32 %v2060, %v2060
        %v2062 = vsel %vm651, %v2061, 0.0
        %2063 = vadd.xlane.f32.xlu0 %v2062
        %v2064 = vpop.xlane.xlu0 %2063
        %v2065 = vmul.f32 %v2064, %v1893
        %v2066 = vadd.f32 %v2065, 1e-05
        %v2067 = vrsqrt.pop %v2066
        %v2068 = vmul.f32 %v2060, %v2067
        %v2070 = vlaneseq
        %v2071 = vshrl.u32 %v2070, 7
        %v2072 = vsub.s32 0, %v2071
        %v2073 = vrot.slane %v2054, %v2072
        %v2075 = vmul.f32 %v2068, %v2073
        %v2077 = vlaneseq
        %v2078 = vshrl.u32 %v2077, 7
        %v2079 = vsub.s32 0, %v2078
        %v2080 = vrot.slane %v2055, %v2079
        %v2082 = vadd.f32 %v2075, %v2080
        %v2083 = vadd.f32 %v1918, %v2082
        %2084 = vst.msk [vmem:[%s631] sm:$0xff] %vm651, %v2083
        %s2085 = sand.u32 %s336, 1
        %s2086 = scalar_lea.sflag [#allocation4], %s2085
        %s2087 = sand.u32 %s336, 1
        %s2088 = smul.addr %s2087, 8
        %s2089 = scalar_lea.vmem [#allocation23], %s2088
        // Predicated region
        $region125: #{tpu_custom_call.1} parent=71 // pred_check
          %p2090 = pneg %p346
        $region126: #{tpu_custom_call.1} parent=71 // pred_check_branch
          %2092 = sbr.rel (%p2090) target = $region128
        $region127: #{tpu_custom_call.1} parent=71 // pred_region
          %s2094 = ssub.s32 128, 128
          %2095 = vsyncadd %s2086, %s2094
          %s2096 = sadd.s32 %s41, %s40
          %s2097 = smul.addr %s2096, 128
          %s2098 = scalar_lea.hbm %s13, %s2097
          %s2100 = sshll.u32 %s2089, 4
          %s2101 = int_to_ptr.vmem [resolvable:$true] %s2100
          %2103 = dma.vmem_to_hbm [thread:$0]  %s2101, 128, %s2098, %s2086
        $region128: #{tpu_custom_call.1} parent=71 // pred_fallthru
          _
      $region72: #{tpu_custom_call.1} parent=5 // pred_fallthru
        _
      %p2104 = scmp.le.s32.totalorder 2, %s31
      // Predicated region
      $region129: #{tpu_custom_call.1} parent=5 // pred_check
        %p2105 = pneg %p2104
      $region130: #{tpu_custom_call.1} parent=5 // pred_check_branch
        %2107 = sbr.rel (%p2105) target = $region132
      $region131: #{tpu_custom_call.1} parent=5 // pred_region
        %s2108 = ssub.s32 %s31, 2
        // Predicated region
        $region133: #{tpu_custom_call.1} parent=131 // pred_check
          %p2109 = pneg %p352
        $region134: #{tpu_custom_call.1} parent=131 // pred_check_branch
          %2111 = sbr.rel (%p2109) target = $region136
        $region135: #{tpu_custom_call.1} parent=131 // pred_region
          %s2112 = sand.u32 %s337, 1
          %s2113 = scalar_lea.sflag [#allocation4], %s2112
          %s2114 = sand.u32 %s337, 1
          %s2115 = smul.addr %s2114, 8
          %s2116 = scalar_lea.vmem [#allocation23], %s2115
          %2117 = dma.done %s2113, 128
        $region136: #{tpu_custom_call.1} parent=131 // pred_fallthru
          _
      $region132: #{tpu_custom_call.1} parent=5 // pred_fallthru
        _
    $region6: #{tpu_custom_call.1} parent=1 // loop_footer
      %s35 = sadd.s32 1, %s31
    $region7: #{tpu_custom_call.1} parent=1 // loop_footer_branch
      %30 = sbr.rel target = $region3
    $region8: #{tpu_custom_call.1} parent=1 // loop_exit
      _
    %2118 = vsyncpa [#allocation3], 1
    %s2119 = scalar_lea.sflag [#allocation3], 1
    %2120 = vsyncpa %s2119, 1
    %2121 = vsyncpa [#allocation6], 1
    %2122 = vsyncpa [#allocation9], 1
    %2123 = vsyncpa [#allocation12], 1
    %2124 = vsyncpa [#allocation15], 1
    %2125 = vsyncpa [#allocation18], 1
    %2126 = vsyncpa [#allocation21], 1
    %2127 = vsyncpa [#allocation4], 1
    %s2128 = scalar_lea.sflag [#allocation4], 1
    %2129 = vsyncpa %s2128, 1

</llo_original>
